<compile_context>
chip_gen: v6e
topology: v6e:2x2x1
jax: 0.10.0
libtpu: 0.0.40
codegen_flags: <defaults>
</compile_context>

<pallas_src>
import functools

import jax
import jax.numpy as jnp
from jax import lax
from jax.experimental import pallas as pl
from jax.experimental.pallas import tpu as pltpu

EPS = 1e-5  # nn.BatchNorm2d default eps


def _rotate_lanes(x, s):
    """result[:, i] = x[:, (i + s) % M] for a static shift s (|s| < M)."""
    if s == 0:
        return x
    return jnp.concatenate([x[:, s:], x[:, :s]], axis=-1)


# ---------------------------------------------------------------------------
# Fused Bottleneck kernel on a lane-dense (C, M = N*H*W) slab.
# ---------------------------------------------------------------------------
def _bottleneck_kernel(x_ref, w1_ref, w2_ref, w3_ref,
                       bn1_ref, bn2_ref, bn3_ref, hh_ref, ww_ref,
                       o_ref, *, h, w, matmul_dtype):
    def mm(a, b):
        return jnp.dot(a.astype(matmul_dtype), b.astype(matmul_dtype),
                       preferred_element_type=jnp.float32)

    def bn_relu(y, bn_ref, residual=None):
        # Training-mode batch statistics over (N, H, W) == the lane axis,
        # folded into a single FMA: out = y * scale + shift.
        gamma = bn_ref[:, 0:1]
        beta = bn_ref[:, 1:2]
        mean = jnp.mean(y, axis=-1, keepdims=True)
        var = jnp.mean((y - mean) ** 2, axis=-1, keepdims=True)
        scale = gamma * lax.rsqrt(var + EPS)
        shift = beta - mean * scale
        out = y * scale + shift
        if residual is not None:
            out = out + residual
        return jnp.maximum(out, 0.0)

    x = x_ref[...]                                  # (C_in, M)  f32
    hh = hh_ref[...]                                # (1, M) spatial row index
    ww = ww_ref[...]                                # (1, M) spatial col index

    # --- conv1 (1x1) + bn1 + relu -----------------------------------------
    out1 = bn_relu(mm(w1_ref[...], x), bn1_ref)     # (width, M)

    # --- conv2 (3x3, stride=1, pad=1): 9 shifted matmuls, VMEM-resident ----
    m = out1.shape[-1]
    acc = jnp.zeros((w2_ref.shape[1], m), jnp.float32)
    for kh in range(3):
        for kw in range(3):
            dh, dw = kh - 1, kw - 1
            tap = w2_ref[kh * 3 + kw]               # (width, width)
            if dh == 0 and dw == 0:
                shifted = out1
            else:
                valid = ((hh + dh >= 0) & (hh + dh < h) &
                         (ww + dw >= 0) & (ww + dw < w))
                shifted = jnp.where(valid, _rotate_lanes(out1, dh * w + dw), 0.0)
            acc = acc + mm(tap, shifted)
    out2 = bn_relu(acc, bn2_ref)                    # (width, M)

    # --- conv3 (1x1) + bn3 + residual + relu (downsample is None) ----------
    out3 = bn_relu(mm(w3_ref[...], out2), bn3_ref, residual=x)
    o_ref[...] = out3.astype(o_ref.dtype)


# ---------------------------------------------------------------------------
# Wrapper: NCHW in / NCHW out, matching PyTorch semantics.
# ---------------------------------------------------------------------------
def bottleneck_forward(x_nchw, params, matmul_dtype=jnp.float32):
    n, c_in, h, w = x_nchw.shape
    m = n * h * w

    w1 = params["w1"][:, :, 0, 0]                         # (width, inplanes)
    width = w1.shape[0]
    # taps[kh*3 + kw] = W2[:, :, kh, kw]  -> (cout=width, cin=width)
    w2 = jnp.transpose(params["w2"], (2, 3, 0, 1)).reshape(9, width, width)
    w3 = params["w3"][:, :, 0, 0]                         # (c_out, width)
    c_out = w3.shape[0]
    assert c_out == c_in, "residual add needs inplanes == planes*expansion"

    bn1 = jnp.stack([params["g1"], params["b1"]], axis=-1)   # (width, 2)
    bn2 = jnp.stack([params["g2"], params["b2"]], axis=-1)   # (width, 2)
    bn3 = jnp.stack([params["g3"], params["b3"]], axis=-1)   # (c_out, 2)

    # Lane-dense slab: channels on sublanes, M = N*H*W on lanes.
    x_t = jnp.transpose(x_nchw, (1, 0, 2, 3)).reshape(c_in, m).astype(jnp.float32)

    # Precomputed spatial indices for the 3x3 boundary masks (tiny int32).
    idx = jnp.arange(m, dtype=jnp.int32)
    hh = ((idx % (h * w)) // w).reshape(1, m)
    ww = (idx % w).reshape(1, m)

    kernel = functools.partial(_bottleneck_kernel, h=h, w=w,
                               matmul_dtype=matmul_dtype)
    vmem = pl.BlockSpec(memory_space=pltpu.MemorySpace.VMEM)
    out_t = pl.pallas_call(
        kernel,
        out_shape=jax.ShapeDtypeStruct((c_out, m), jnp.float32),
        in_specs=[vmem] * 9,
        out_specs=vmem,
        compiler_params=pltpu.CompilerParams(vmem_limit_bytes=32 * 1024 * 1024),
    )(x_t, w1, w2, w3, bn1, bn2, bn3, hh, ww)

    # TODO(synk): for production-scale M (e.g. 64*56*56) add an M-tiled grid
    # with global sum/sumsq BN accumulators (two-pass) and halo handling for
    # the 3x3 taps; at these shapes the whole working set (<1 MiB) fits in
    # one VMEM block on every TPU generation (incl. v7x's 64 MiB).
    # TODO(synk): stride>1 / downsample / groups>1 Bottleneck variants are
    # not implemented (module defaults are used).
    return out_t.reshape(c_out, n, h, w).transpose(1, 0, 2, 3)


# ---------------------------------------------------------------------------
# Pure-JAX reference (lax.conv) for a sanity check.
# ---------------------------------------------------------------------------
def _bn_train(x_nchw, gamma, beta):
    mean = jnp.mean(x_nchw, axis=(0, 2, 3), keepdims=True)
    var = jnp.mean((x_nchw - mean) ** 2, axis=(0, 2, 3), keepdims=True)
    g = gamma.reshape(1, -1, 1, 1)
    b = beta.reshape(1, -1, 1, 1)
    return (x_nchw - mean) * lax.rsqrt(var + EPS) * g + b


def bottleneck_reference(x, p):
    dn = ("NCHW", "OIHW", "NCHW")
    out = lax.conv_general_dilated(x, p["w1"], (1, 1), "VALID", dimension_numbers=dn)
    out = jnp.maximum(_bn_train(out, p["g1"], p["b1"]), 0.0)
    out = lax.conv_general_dilated(out, p["w2"], (1, 1), ((1, 1), (1, 1)),
                                   dimension_numbers=dn)
    out = jnp.maximum(_bn_train(out, p["g2"], p["b2"]), 0.0)
    out = lax.conv_general_dilated(out, p["w3"], (1, 1), "VALID", dimension_numbers=dn)
    out = _bn_train(out, p["g3"], p["b3"]) + x
    return jnp.maximum(out, 0.0)


if __name__ == "__main__":
    # Bottleneck(inplanes=16, planes=4): width=4, output channels=16.
    inplanes, planes = 16, 4
    width = planes           # base_width=64, groups=1
    c_out = planes * 4       # expansion = 4
    n, h, w_sp = 2, 16, 16   # M = N*H*W = 512 (lane-dense, multiple of 128)

    key = jax.random.PRNGKey(0)
    k1, k2, k3, kx = jax.random.split(key, 4)
    params = {
        "w1": 0.1 * jax.random.normal(k1, (width, inplanes, 1, 1), jnp.float32),
        "w2": 0.1 * jax.random.normal(k2, (width, width, 3, 3), jnp.float32),
        "w3": 0.1 * jax.random.normal(k3, (c_out, width, 1, 1), jnp.float32),
        # BatchNorm default init: weight=1, bias=0 (training-mode batch stats)
        "g1": jnp.ones((width,), jnp.float32),
        "b1": jnp.zeros((width,), jnp.float32),
        "g2": jnp.ones((width,), jnp.float32),
        "b2": jnp.zeros((width,), jnp.float32),
        "g3": jnp.ones((c_out,), jnp.float32),
        "b3": jnp.zeros((c_out,), jnp.float32),
    }

    x = jax.random.normal(kx, (n, inplanes, h, w_sp), jnp.float32)

    out = jax.block_until_ready(bottleneck_forward(x, params))
    ref = jax.block_until_ready(bottleneck_reference(x, params))

    assert out.shape == (n, c_out, h, w_sp), out.shape
    assert jnp.allclose(out, ref, atol=1e-3, rtol=1e-3), float(jnp.max(jnp.abs(out - ref)))
    print("KERNEL_OK")
</pallas_src>

<mosaic_0001>
module attributes {stable_mosaic.version = 11 : i64} {
  func.func @_bottleneck_kernel(%arg0: memref<16x512xf32, #tpu.memory_space<vmem>>, %arg1: memref<4x16xf32, #tpu.memory_space<vmem>>, %arg2: memref<9x4x4xf32, #tpu.memory_space<vmem>>, %arg3: memref<16x4xf32, #tpu.memory_space<vmem>>, %arg4: memref<4x2xf32, #tpu.memory_space<vmem>>, %arg5: memref<4x2xf32, #tpu.memory_space<vmem>>, %arg6: memref<16x2xf32, #tpu.memory_space<vmem>>, %arg7: memref<1x512xi32, #tpu.memory_space<vmem>>, %arg8: memref<1x512xi32, #tpu.memory_space<vmem>>, %arg9: memref<16x512xf32, #tpu.memory_space<vmem>>) attributes {dimension_semantics = [], scalar_prefetch = 0 : i64, scratch_operands = 0 : i64, tpu.core_type = #tpu.core_type<tc>} {
    %c0 = arith.constant 0 : index
    %c0_0 = arith.constant 0 : index
    %0 = vector.load %arg0[%c0, %c0_0] : memref<16x512xf32, #tpu.memory_space<vmem>>, vector<16x512xf32>
    %c0_1 = arith.constant 0 : index
    %c0_2 = arith.constant 0 : index
    %1 = vector.load %arg7[%c0_1, %c0_2] : memref<1x512xi32, #tpu.memory_space<vmem>>, vector<1x512xi32>
    %c0_3 = arith.constant 0 : index
    %c0_4 = arith.constant 0 : index
    %2 = vector.load %arg8[%c0_3, %c0_4] : memref<1x512xi32, #tpu.memory_space<vmem>>, vector<1x512xi32>
    %c0_5 = arith.constant 0 : index
    %c0_6 = arith.constant 0 : index
    %3 = vector.load %arg1[%c0_5, %c0_6] : memref<4x16xf32, #tpu.memory_space<vmem>>, vector<4x16xf32>
    %cst = arith.constant dense<0.000000e+00> : vector<4x512xf32>
    %4 = tpu.matmul %3, %0, %cst {dimension_numbers = #tpu.dot_dimension_numbers<[1], [0], [0], [1], [0, 0, 1, 1], [], []>} : vector<4x16xf32>, vector<16x512xf32>, vector<4x512xf32> -> vector<4x512xf32>
    %c0_7 = arith.constant 0 : index
    %c0_8 = arith.constant 0 : index
    %5 = vector.load %arg4[%c0_7, %c0_8] : memref<4x2xf32, #tpu.memory_space<vmem>>, vector<4x1xf32>
    %c0_9 = arith.constant 0 : index
    %c1 = arith.constant 1 : index
    %6 = vector.load %arg4[%c0_9, %c1] : memref<4x2xf32, #tpu.memory_space<vmem>>, vector<4x1xf32>
    %cst_10 = arith.constant dense<0.000000e+00> : vector<4xf32>
    %7 = vector.multi_reduction <add>, %4, %cst_10 [1] : vector<4x512xf32> to vector<4xf32>
    %8 = vector.shape_cast %7 : vector<4xf32> to vector<4x1xf32>
    %cst_11 = arith.constant 5.120000e+02 : f32
    %9 = vector.broadcast %cst_11 : f32 to vector<4x1xf32>
    %10 = arith.divf %8, %9 : vector<4x1xf32>
    %11 = vector.broadcast %10 : vector<4x1xf32> to vector<4x512xf32>
    %12 = arith.subf %4, %11 : vector<4x512xf32>
    %13 = arith.mulf %12, %12 : vector<4x512xf32>
    %cst_12 = arith.constant dense<0.000000e+00> : vector<4xf32>
    %14 = vector.multi_reduction <add>, %13, %cst_12 [1] : vector<4x512xf32> to vector<4xf32>
    %15 = vector.shape_cast %14 : vector<4xf32> to vector<4x1xf32>
    %cst_13 = arith.constant 5.120000e+02 : f32
    %16 = vector.broadcast %cst_13 : f32 to vector<4x1xf32>
    %17 = arith.divf %15, %16 : vector<4x1xf32>
    %cst_14 = arith.constant 9.99999974E-6 : f32
    %18 = vector.broadcast %cst_14 : f32 to vector<4x1xf32>
    %19 = arith.addf %17, %18 : vector<4x1xf32>
    %20 = math.rsqrt %19 : vector<4x1xf32>
    %21 = arith.mulf %5, %20 : vector<4x1xf32>
    %22 = arith.mulf %10, %21 : vector<4x1xf32>
    %23 = arith.subf %6, %22 : vector<4x1xf32>
    %24 = vector.broadcast %21 : vector<4x1xf32> to vector<4x512xf32>
    %25 = arith.mulf %4, %24 : vector<4x512xf32>
    %26 = vector.broadcast %23 : vector<4x1xf32> to vector<4x512xf32>
    %27 = arith.addf %25, %26 : vector<4x512xf32>
    %cst_15 = arith.constant 0.000000e+00 : f32
    %28 = vector.broadcast %cst_15 : f32 to vector<4x512xf32>
    %29 = arith.maximumf %27, %28 : vector<4x512xf32>
    %cst_16 = arith.constant 0.000000e+00 : f32
    %30 = vector.broadcast %cst_16 : f32 to vector<4x512xf32>
    %c0_17 = arith.constant 0 : index
    %c0_18 = arith.constant 0 : index
    %c0_19 = arith.constant 0 : index
    %31 = vector.load %arg2[%c0_17, %c0_18, %c0_19] : memref<9x4x4xf32, #tpu.memory_space<vmem>>, vector<1x4x4xf32>
    %32 = vector.shape_cast %31 : vector<1x4x4xf32> to vector<4x4xf32>
    %c-1_i32 = arith.constant -1 : i32
    %33 = vector.broadcast %c-1_i32 : i32 to vector<1x512xi32>
    %34 = arith.addi %1, %33 : vector<1x512xi32>
    %c0_i32 = arith.constant 0 : i32
    %35 = vector.broadcast %c0_i32 : i32 to vector<1x512xi32>
    %36 = arith.cmpi sge, %34, %35 : vector<1x512xi32>
    %c-1_i32_20 = arith.constant -1 : i32
    %37 = vector.broadcast %c-1_i32_20 : i32 to vector<1x512xi32>
    %38 = arith.addi %1, %37 : vector<1x512xi32>
    %c16_i32 = arith.constant 16 : i32
    %39 = vector.broadcast %c16_i32 : i32 to vector<1x512xi32>
    %40 = arith.cmpi slt, %38, %39 : vector<1x512xi32>
    %41 = arith.andi %36, %40 : vector<1x512xi1>
    %c-1_i32_21 = arith.constant -1 : i32
    %42 = vector.broadcast %c-1_i32_21 : i32 to vector<1x512xi32>
    %43 = arith.addi %2, %42 : vector<1x512xi32>
    %c0_i32_22 = arith.constant 0 : i32
    %44 = vector.broadcast %c0_i32_22 : i32 to vector<1x512xi32>
    %45 = arith.cmpi sge, %43, %44 : vector<1x512xi32>
    %46 = arith.andi %41, %45 : vector<1x512xi1>
    %c-1_i32_23 = arith.constant -1 : i32
    %47 = vector.broadcast %c-1_i32_23 : i32 to vector<1x512xi32>
    %48 = arith.addi %2, %47 : vector<1x512xi32>
    %c16_i32_24 = arith.constant 16 : i32
    %49 = vector.broadcast %c16_i32_24 : i32 to vector<1x512xi32>
    %50 = arith.cmpi slt, %48, %49 : vector<1x512xi32>
    %51 = arith.andi %46, %50 : vector<1x512xi1>
    %52 = vector.extract_strided_slice %29 {offsets = [0, 495], sizes = [4, 17], strides = [1, 1]} : vector<4x512xf32> to vector<4x17xf32>
    %53 = vector.extract_strided_slice %29 {offsets = [0, 0], sizes = [4, 495], strides = [1, 1]} : vector<4x512xf32> to vector<4x495xf32>
    %54 = tpu.concatenate %52, %53 in 1 : vector<4x17xf32>, vector<4x495xf32> -> vector<4x512xf32>
    %cst_25 = arith.constant 0.000000e+00 : f32
    %55 = vector.shape_cast %51 : vector<1x512xi1> to vector<1x512xi1>
    %56 = vector.broadcast %55 : vector<1x512xi1> to vector<4x512xi1>
    %57 = vector.broadcast %cst_25 : f32 to vector<4x512xf32>
    %58 = arith.select %56, %54, %57 : vector<4x512xi1>, vector<4x512xf32>
    %cst_26 = arith.constant dense<0.000000e+00> : vector<4x512xf32>
    %59 = tpu.matmul %32, %58, %cst_26 {dimension_numbers = #tpu.dot_dimension_numbers<[1], [0], [0], [1], [0, 0, 1, 1], [], []>} : vector<4x4xf32>, vector<4x512xf32>, vector<4x512xf32> -> vector<4x512xf32>
    %60 = arith.addf %30, %59 : vector<4x512xf32>
    %c1_27 = arith.constant 1 : index
    %c0_28 = arith.constant 0 : index
    %c0_29 = arith.constant 0 : index
    %61 = vector.load %arg2[%c1_27, %c0_28, %c0_29] : memref<9x4x4xf32, #tpu.memory_space<vmem>>, vector<1x4x4xf32>
    %62 = vector.shape_cast %61 : vector<1x4x4xf32> to vector<4x4xf32>
    %c-1_i32_30 = arith.constant -1 : i32
    %63 = vector.broadcast %c-1_i32_30 : i32 to vector<1x512xi32>
    %64 = arith.addi %1, %63 : vector<1x512xi32>
    %c0_i32_31 = arith.constant 0 : i32
    %65 = vector.broadcast %c0_i32_31 : i32 to vector<1x512xi32>
    %66 = arith.cmpi sge, %64, %65 : vector<1x512xi32>
    %c-1_i32_32 = arith.constant -1 : i32
    %67 = vector.broadcast %c-1_i32_32 : i32 to vector<1x512xi32>
    %68 = arith.addi %1, %67 : vector<1x512xi32>
    %c16_i32_33 = arith.constant 16 : i32
    %69 = vector.broadcast %c16_i32_33 : i32 to vector<1x512xi32>
    %70 = arith.cmpi slt, %68, %69 : vector<1x512xi32>
    %71 = arith.andi %66, %70 : vector<1x512xi1>
    %c0_i32_34 = arith.constant 0 : i32
    %72 = vector.broadcast %c0_i32_34 : i32 to vector<1x512xi32>
    %73 = arith.addi %2, %72 : vector<1x512xi32>
    %c0_i32_35 = arith.constant 0 : i32
    %74 = vector.broadcast %c0_i32_35 : i32 to vector<1x512xi32>
    %75 = arith.cmpi sge, %73, %74 : vector<1x512xi32>
    %76 = arith.andi %71, %75 : vector<1x512xi1>
    %c0_i32_36 = arith.constant 0 : i32
    %77 = vector.broadcast %c0_i32_36 : i32 to vector<1x512xi32>
    %78 = arith.addi %2, %77 : vector<1x512xi32>
    %c16_i32_37 = arith.constant 16 : i32
    %79 = vector.broadcast %c16_i32_37 : i32 to vector<1x512xi32>
    %80 = arith.cmpi slt, %78, %79 : vector<1x512xi32>
    %81 = arith.andi %76, %80 : vector<1x512xi1>
    %82 = vector.extract_strided_slice %29 {offsets = [0, 496], sizes = [4, 16], strides = [1, 1]} : vector<4x512xf32> to vector<4x16xf32>
    %83 = vector.extract_strided_slice %29 {offsets = [0, 0], sizes = [4, 496], strides = [1, 1]} : vector<4x512xf32> to vector<4x496xf32>
    %84 = tpu.concatenate %82, %83 in 1 : vector<4x16xf32>, vector<4x496xf32> -> vector<4x512xf32>
    %cst_38 = arith.constant 0.000000e+00 : f32
    %85 = vector.shape_cast %81 : vector<1x512xi1> to vector<1x512xi1>
    %86 = vector.broadcast %85 : vector<1x512xi1> to vector<4x512xi1>
    %87 = vector.broadcast %cst_38 : f32 to vector<4x512xf32>
    %88 = arith.select %86, %84, %87 : vector<4x512xi1>, vector<4x512xf32>
    %cst_39 = arith.constant dense<0.000000e+00> : vector<4x512xf32>
    %89 = tpu.matmul %62, %88, %cst_39 {dimension_numbers = #tpu.dot_dimension_numbers<[1], [0], [0], [1], [0, 0, 1, 1], [], []>} : vector<4x4xf32>, vector<4x512xf32>, vector<4x512xf32> -> vector<4x512xf32>
    %90 = arith.addf %60, %89 : vector<4x512xf32>
    %c2 = arith.constant 2 : index
    %c0_40 = arith.constant 0 : index
    %c0_41 = arith.constant 0 : index
    %91 = vector.load %arg2[%c2, %c0_40, %c0_41] : memref<9x4x4xf32, #tpu.memory_space<vmem>>, vector<1x4x4xf32>
    %92 = vector.shape_cast %91 : vector<1x4x4xf32> to vector<4x4xf32>
    %c-1_i32_42 = arith.constant -1 : i32
    %93 = vector.broadcast %c-1_i32_42 : i32 to vector<1x512xi32>
    %94 = arith.addi %1, %93 : vector<1x512xi32>
    %c0_i32_43 = arith.constant 0 : i32
    %95 = vector.broadcast %c0_i32_43 : i32 to vector<1x512xi32>
    %96 = arith.cmpi sge, %94, %95 : vector<1x512xi32>
    %c-1_i32_44 = arith.constant -1 : i32
    %97 = vector.broadcast %c-1_i32_44 : i32 to vector<1x512xi32>
    %98 = arith.addi %1, %97 : vector<1x512xi32>
    %c16_i32_45 = arith.constant 16 : i32
    %99 = vector.broadcast %c16_i32_45 : i32 to vector<1x512xi32>
    %100 = arith.cmpi slt, %98, %99 : vector<1x512xi32>
    %101 = arith.andi %96, %100 : vector<1x512xi1>
    %c1_i32 = arith.constant 1 : i32
    %102 = vector.broadcast %c1_i32 : i32 to vector<1x512xi32>
    %103 = arith.addi %2, %102 : vector<1x512xi32>
    %c0_i32_46 = arith.constant 0 : i32
    %104 = vector.broadcast %c0_i32_46 : i32 to vector<1x512xi32>
    %105 = arith.cmpi sge, %103, %104 : vector<1x512xi32>
    %106 = arith.andi %101, %105 : vector<1x512xi1>
    %c1_i32_47 = arith.constant 1 : i32
    %107 = vector.broadcast %c1_i32_47 : i32 to vector<1x512xi32>
    %108 = arith.addi %2, %107 : vector<1x512xi32>
    %c16_i32_48 = arith.constant 16 : i32
    %109 = vector.broadcast %c16_i32_48 : i32 to vector<1x512xi32>
    %110 = arith.cmpi slt, %108, %109 : vector<1x512xi32>
    %111 = arith.andi %106, %110 : vector<1x512xi1>
    %112 = vector.extract_strided_slice %29 {offsets = [0, 497], sizes = [4, 15], strides = [1, 1]} : vector<4x512xf32> to vector<4x15xf32>
    %113 = vector.extract_strided_slice %29 {offsets = [0, 0], sizes = [4, 497], strides = [1, 1]} : vector<4x512xf32> to vector<4x497xf32>
    %114 = tpu.concatenate %112, %113 in 1 : vector<4x15xf32>, vector<4x497xf32> -> vector<4x512xf32>
    %cst_49 = arith.constant 0.000000e+00 : f32
    %115 = vector.shape_cast %111 : vector<1x512xi1> to vector<1x512xi1>
    %116 = vector.broadcast %115 : vector<1x512xi1> to vector<4x512xi1>
    %117 = vector.broadcast %cst_49 : f32 to vector<4x512xf32>
    %118 = arith.select %116, %114, %117 : vector<4x512xi1>, vector<4x512xf32>
    %cst_50 = arith.constant dense<0.000000e+00> : vector<4x512xf32>
    %119 = tpu.matmul %92, %118, %cst_50 {dimension_numbers = #tpu.dot_dimension_numbers<[1], [0], [0], [1], [0, 0, 1, 1], [], []>} : vector<4x4xf32>, vector<4x512xf32>, vector<4x512xf32> -> vector<4x512xf32>
    %120 = arith.addf %90, %119 : vector<4x512xf32>
    %c3 = arith.constant 3 : index
    %c0_51 = arith.constant 0 : index
    %c0_52 = arith.constant 0 : index
    %121 = vector.load %arg2[%c3, %c0_51, %c0_52] : memref<9x4x4xf32, #tpu.memory_space<vmem>>, vector<1x4x4xf32>
    %122 = vector.shape_cast %121 : vector<1x4x4xf32> to vector<4x4xf32>
    %c0_i32_53 = arith.constant 0 : i32
    %123 = vector.broadcast %c0_i32_53 : i32 to vector<1x512xi32>
    %124 = arith.addi %1, %123 : vector<1x512xi32>
    %c0_i32_54 = arith.constant 0 : i32
    %125 = vector.broadcast %c0_i32_54 : i32 to vector<1x512xi32>
    %126 = arith.cmpi sge, %124, %125 : vector<1x512xi32>
    %c0_i32_55 = arith.constant 0 : i32
    %127 = vector.broadcast %c0_i32_55 : i32 to vector<1x512xi32>
    %128 = arith.addi %1, %127 : vector<1x512xi32>
    %c16_i32_56 = arith.constant 16 : i32
    %129 = vector.broadcast %c16_i32_56 : i32 to vector<1x512xi32>
    %130 = arith.cmpi slt, %128, %129 : vector<1x512xi32>
    %131 = arith.andi %126, %130 : vector<1x512xi1>
    %c-1_i32_57 = arith.constant -1 : i32
    %132 = vector.broadcast %c-1_i32_57 : i32 to vector<1x512xi32>
    %133 = arith.addi %2, %132 : vector<1x512xi32>
    %c0_i32_58 = arith.constant 0 : i32
    %134 = vector.broadcast %c0_i32_58 : i32 to vector<1x512xi32>
    %135 = arith.cmpi sge, %133, %134 : vector<1x512xi32>
    %136 = arith.andi %131, %135 : vector<1x512xi1>
    %c-1_i32_59 = arith.constant -1 : i32
    %137 = vector.broadcast %c-1_i32_59 : i32 to vector<1x512xi32>
    %138 = arith.addi %2, %137 : vector<1x512xi32>
    %c16_i32_60 = arith.constant 16 : i32
    %139 = vector.broadcast %c16_i32_60 : i32 to vector<1x512xi32>
    %140 = arith.cmpi slt, %138, %139 : vector<1x512xi32>
    %141 = arith.andi %136, %140 : vector<1x512xi1>
    %142 = vector.extract_strided_slice %29 {offsets = [0, 511], sizes = [4, 1], strides = [1, 1]} : vector<4x512xf32> to vector<4x1xf32>
    %143 = vector.extract_strided_slice %29 {offsets = [0, 0], sizes = [4, 511], strides = [1, 1]} : vector<4x512xf32> to vector<4x511xf32>
    %144 = tpu.concatenate %142, %143 in 1 : vector<4x1xf32>, vector<4x511xf32> -> vector<4x512xf32>
    %cst_61 = arith.constant 0.000000e+00 : f32
    %145 = vector.shape_cast %141 : vector<1x512xi1> to vector<1x512xi1>
    %146 = vector.broadcast %145 : vector<1x512xi1> to vector<4x512xi1>
    %147 = vector.broadcast %cst_61 : f32 to vector<4x512xf32>
    %148 = arith.select %146, %144, %147 : vector<4x512xi1>, vector<4x512xf32>
    %cst_62 = arith.constant dense<0.000000e+00> : vector<4x512xf32>
    %149 = tpu.matmul %122, %148, %cst_62 {dimension_numbers = #tpu.dot_dimension_numbers<[1], [0], [0], [1], [0, 0, 1, 1], [], []>} : vector<4x4xf32>, vector<4x512xf32>, vector<4x512xf32> -> vector<4x512xf32>
    %150 = arith.addf %120, %149 : vector<4x512xf32>
    %c4 = arith.constant 4 : index
    %c0_63 = arith.constant 0 : index
    %c0_64 = arith.constant 0 : index
    %151 = vector.load %arg2[%c4, %c0_63, %c0_64] : memref<9x4x4xf32, #tpu.memory_space<vmem>>, vector<1x4x4xf32>
    %152 = vector.shape_cast %151 : vector<1x4x4xf32> to vector<4x4xf32>
    %cst_65 = arith.constant dense<0.000000e+00> : vector<4x512xf32>
    %153 = tpu.matmul %152, %29, %cst_65 {dimension_numbers = #tpu.dot_dimension_numbers<[1], [0], [0], [1], [0, 0, 1, 1], [], []>} : vector<4x4xf32>, vector<4x512xf32>, vector<4x512xf32> -> vector<4x512xf32>
    %154 = arith.addf %150, %153 : vector<4x512xf32>
    %c5 = arith.constant 5 : index
    %c0_66 = arith.constant 0 : index
    %c0_67 = arith.constant 0 : index
    %155 = vector.load %arg2[%c5, %c0_66, %c0_67] : memref<9x4x4xf32, #tpu.memory_space<vmem>>, vector<1x4x4xf32>
    %156 = vector.shape_cast %155 : vector<1x4x4xf32> to vector<4x4xf32>
    %c0_i32_68 = arith.constant 0 : i32
    %157 = vector.broadcast %c0_i32_68 : i32 to vector<1x512xi32>
    %158 = arith.addi %1, %157 : vector<1x512xi32>
    %c0_i32_69 = arith.constant 0 : i32
    %159 = vector.broadcast %c0_i32_69 : i32 to vector<1x512xi32>
    %160 = arith.cmpi sge, %158, %159 : vector<1x512xi32>
    %c0_i32_70 = arith.constant 0 : i32
    %161 = vector.broadcast %c0_i32_70 : i32 to vector<1x512xi32>
    %162 = arith.addi %1, %161 : vector<1x512xi32>
    %c16_i32_71 = arith.constant 16 : i32
    %163 = vector.broadcast %c16_i32_71 : i32 to vector<1x512xi32>
    %164 = arith.cmpi slt, %162, %163 : vector<1x512xi32>
    %165 = arith.andi %160, %164 : vector<1x512xi1>
    %c1_i32_72 = arith.constant 1 : i32
    %166 = vector.broadcast %c1_i32_72 : i32 to vector<1x512xi32>
    %167 = arith.addi %2, %166 : vector<1x512xi32>
    %c0_i32_73 = arith.constant 0 : i32
    %168 = vector.broadcast %c0_i32_73 : i32 to vector<1x512xi32>
    %169 = arith.cmpi sge, %167, %168 : vector<1x512xi32>
    %170 = arith.andi %165, %169 : vector<1x512xi1>
    %c1_i32_74 = arith.constant 1 : i32
    %171 = vector.broadcast %c1_i32_74 : i32 to vector<1x512xi32>
    %172 = arith.addi %2, %171 : vector<1x512xi32>
    %c16_i32_75 = arith.constant 16 : i32
    %173 = vector.broadcast %c16_i32_75 : i32 to vector<1x512xi32>
    %174 = arith.cmpi slt, %172, %173 : vector<1x512xi32>
    %175 = arith.andi %170, %174 : vector<1x512xi1>
    %176 = vector.extract_strided_slice %29 {offsets = [0, 1], sizes = [4, 511], strides = [1, 1]} : vector<4x512xf32> to vector<4x511xf32>
    %177 = vector.extract_strided_slice %29 {offsets = [0, 0], sizes = [4, 1], strides = [1, 1]} : vector<4x512xf32> to vector<4x1xf32>
    %178 = tpu.concatenate %176, %177 in 1 : vector<4x511xf32>, vector<4x1xf32> -> vector<4x512xf32>
    %cst_76 = arith.constant 0.000000e+00 : f32
    %179 = vector.shape_cast %175 : vector<1x512xi1> to vector<1x512xi1>
    %180 = vector.broadcast %179 : vector<1x512xi1> to vector<4x512xi1>
    %181 = vector.broadcast %cst_76 : f32 to vector<4x512xf32>
    %182 = arith.select %180, %178, %181 : vector<4x512xi1>, vector<4x512xf32>
    %cst_77 = arith.constant dense<0.000000e+00> : vector<4x512xf32>
    %183 = tpu.matmul %156, %182, %cst_77 {dimension_numbers = #tpu.dot_dimension_numbers<[1], [0], [0], [1], [0, 0, 1, 1], [], []>} : vector<4x4xf32>, vector<4x512xf32>, vector<4x512xf32> -> vector<4x512xf32>
    %184 = arith.addf %154, %183 : vector<4x512xf32>
    %c6 = arith.constant 6 : index
    %c0_78 = arith.constant 0 : index
    %c0_79 = arith.constant 0 : index
    %185 = vector.load %arg2[%c6, %c0_78, %c0_79] : memref<9x4x4xf32, #tpu.memory_space<vmem>>, vector<1x4x4xf32>
    %186 = vector.shape_cast %185 : vector<1x4x4xf32> to vector<4x4xf32>
    %c1_i32_80 = arith.constant 1 : i32
    %187 = vector.broadcast %c1_i32_80 : i32 to vector<1x512xi32>
    %188 = arith.addi %1, %187 : vector<1x512xi32>
    %c0_i32_81 = arith.constant 0 : i32
    %189 = vector.broadcast %c0_i32_81 : i32 to vector<1x512xi32>
    %190 = arith.cmpi sge, %188, %189 : vector<1x512xi32>
    %c1_i32_82 = arith.constant 1 : i32
    %191 = vector.broadcast %c1_i32_82 : i32 to vector<1x512xi32>
    %192 = arith.addi %1, %191 : vector<1x512xi32>
    %c16_i32_83 = arith.constant 16 : i32
    %193 = vector.broadcast %c16_i32_83 : i32 to vector<1x512xi32>
    %194 = arith.cmpi slt, %192, %193 : vector<1x512xi32>
    %195 = arith.andi %190, %194 : vector<1x512xi1>
    %c-1_i32_84 = arith.constant -1 : i32
    %196 = vector.broadcast %c-1_i32_84 : i32 to vector<1x512xi32>
    %197 = arith.addi %2, %196 : vector<1x512xi32>
    %c0_i32_85 = arith.constant 0 : i32
    %198 = vector.broadcast %c0_i32_85 : i32 to vector<1x512xi32>
    %199 = arith.cmpi sge, %197, %198 : vector<1x512xi32>
    %200 = arith.andi %195, %199 : vector<1x512xi1>
    %c-1_i32_86 = arith.constant -1 : i32
    %201 = vector.broadcast %c-1_i32_86 : i32 to vector<1x512xi32>
    %202 = arith.addi %2, %201 : vector<1x512xi32>
    %c16_i32_87 = arith.constant 16 : i32
    %203 = vector.broadcast %c16_i32_87 : i32 to vector<1x512xi32>
    %204 = arith.cmpi slt, %202, %203 : vector<1x512xi32>
    %205 = arith.andi %200, %204 : vector<1x512xi1>
    %206 = vector.extract_strided_slice %29 {offsets = [0, 15], sizes = [4, 497], strides = [1, 1]} : vector<4x512xf32> to vector<4x497xf32>
    %207 = vector.extract_strided_slice %29 {offsets = [0, 0], sizes = [4, 15], strides = [1, 1]} : vector<4x512xf32> to vector<4x15xf32>
    %208 = tpu.concatenate %206, %207 in 1 : vector<4x497xf32>, vector<4x15xf32> -> vector<4x512xf32>
    %cst_88 = arith.constant 0.000000e+00 : f32
    %209 = vector.shape_cast %205 : vector<1x512xi1> to vector<1x512xi1>
    %210 = vector.broadcast %209 : vector<1x512xi1> to vector<4x512xi1>
    %211 = vector.broadcast %cst_88 : f32 to vector<4x512xf32>
    %212 = arith.select %210, %208, %211 : vector<4x512xi1>, vector<4x512xf32>
    %cst_89 = arith.constant dense<0.000000e+00> : vector<4x512xf32>
    %213 = tpu.matmul %186, %212, %cst_89 {dimension_numbers = #tpu.dot_dimension_numbers<[1], [0], [0], [1], [0, 0, 1, 1], [], []>} : vector<4x4xf32>, vector<4x512xf32>, vector<4x512xf32> -> vector<4x512xf32>
    %214 = arith.addf %184, %213 : vector<4x512xf32>
    %c7 = arith.constant 7 : index
    %c0_90 = arith.constant 0 : index
    %c0_91 = arith.constant 0 : index
    %215 = vector.load %arg2[%c7, %c0_90, %c0_91] : memref<9x4x4xf32, #tpu.memory_space<vmem>>, vector<1x4x4xf32>
    %216 = vector.shape_cast %215 : vector<1x4x4xf32> to vector<4x4xf32>
    %c1_i32_92 = arith.constant 1 : i32
    %217 = vector.broadcast %c1_i32_92 : i32 to vector<1x512xi32>
    %218 = arith.addi %1, %217 : vector<1x512xi32>
    %c0_i32_93 = arith.constant 0 : i32
    %219 = vector.broadcast %c0_i32_93 : i32 to vector<1x512xi32>
    %220 = arith.cmpi sge, %218, %219 : vector<1x512xi32>
    %c1_i32_94 = arith.constant 1 : i32
    %221 = vector.broadcast %c1_i32_94 : i32 to vector<1x512xi32>
    %222 = arith.addi %1, %221 : vector<1x512xi32>
    %c16_i32_95 = arith.constant 16 : i32
    %223 = vector.broadcast %c16_i32_95 : i32 to vector<1x512xi32>
    %224 = arith.cmpi slt, %222, %223 : vector<1x512xi32>
    %225 = arith.andi %220, %224 : vector<1x512xi1>
    %c0_i32_96 = arith.constant 0 : i32
    %226 = vector.broadcast %c0_i32_96 : i32 to vector<1x512xi32>
    %227 = arith.addi %2, %226 : vector<1x512xi32>
    %c0_i32_97 = arith.constant 0 : i32
    %228 = vector.broadcast %c0_i32_97 : i32 to vector<1x512xi32>
    %229 = arith.cmpi sge, %227, %228 : vector<1x512xi32>
    %230 = arith.andi %225, %229 : vector<1x512xi1>
    %c0_i32_98 = arith.constant 0 : i32
    %231 = vector.broadcast %c0_i32_98 : i32 to vector<1x512xi32>
    %232 = arith.addi %2, %231 : vector<1x512xi32>
    %c16_i32_99 = arith.constant 16 : i32
    %233 = vector.broadcast %c16_i32_99 : i32 to vector<1x512xi32>
    %234 = arith.cmpi slt, %232, %233 : vector<1x512xi32>
    %235 = arith.andi %230, %234 : vector<1x512xi1>
    %236 = vector.extract_strided_slice %29 {offsets = [0, 16], sizes = [4, 496], strides = [1, 1]} : vector<4x512xf32> to vector<4x496xf32>
    %237 = vector.extract_strided_slice %29 {offsets = [0, 0], sizes = [4, 16], strides = [1, 1]} : vector<4x512xf32> to vector<4x16xf32>
    %238 = tpu.concatenate %236, %237 in 1 : vector<4x496xf32>, vector<4x16xf32> -> vector<4x512xf32>
    %cst_100 = arith.constant 0.000000e+00 : f32
    %239 = vector.shape_cast %235 : vector<1x512xi1> to vector<1x512xi1>
    %240 = vector.broadcast %239 : vector<1x512xi1> to vector<4x512xi1>
    %241 = vector.broadcast %cst_100 : f32 to vector<4x512xf32>
    %242 = arith.select %240, %238, %241 : vector<4x512xi1>, vector<4x512xf32>
    %cst_101 = arith.constant dense<0.000000e+00> : vector<4x512xf32>
    %243 = tpu.matmul %216, %242, %cst_101 {dimension_numbers = #tpu.dot_dimension_numbers<[1], [0], [0], [1], [0, 0, 1, 1], [], []>} : vector<4x4xf32>, vector<4x512xf32>, vector<4x512xf32> -> vector<4x512xf32>
    %244 = arith.addf %214, %243 : vector<4x512xf32>
    %c8 = arith.constant 8 : index
    %c0_102 = arith.constant 0 : index
    %c0_103 = arith.constant 0 : index
    %245 = vector.load %arg2[%c8, %c0_102, %c0_103] : memref<9x4x4xf32, #tpu.memory_space<vmem>>, vector<1x4x4xf32>
    %246 = vector.shape_cast %245 : vector<1x4x4xf32> to vector<4x4xf32>
    %c1_i32_104 = arith.constant 1 : i32
    %247 = vector.broadcast %c1_i32_104 : i32 to vector<1x512xi32>
    %248 = arith.addi %1, %247 : vector<1x512xi32>
    %c0_i32_105 = arith.constant 0 : i32
    %249 = vector.broadcast %c0_i32_105 : i32 to vector<1x512xi32>
    %250 = arith.cmpi sge, %248, %249 : vector<1x512xi32>
    %c1_i32_106 = arith.constant 1 : i32
    %251 = vector.broadcast %c1_i32_106 : i32 to vector<1x512xi32>
    %252 = arith.addi %1, %251 : vector<1x512xi32>
    %c16_i32_107 = arith.constant 16 : i32
    %253 = vector.broadcast %c16_i32_107 : i32 to vector<1x512xi32>
    %254 = arith.cmpi slt, %252, %253 : vector<1x512xi32>
    %255 = arith.andi %250, %254 : vector<1x512xi1>
    %c1_i32_108 = arith.constant 1 : i32
    %256 = vector.broadcast %c1_i32_108 : i32 to vector<1x512xi32>
    %257 = arith.addi %2, %256 : vector<1x512xi32>
    %c0_i32_109 = arith.constant 0 : i32
    %258 = vector.broadcast %c0_i32_109 : i32 to vector<1x512xi32>
    %259 = arith.cmpi sge, %257, %258 : vector<1x512xi32>
    %260 = arith.andi %255, %259 : vector<1x512xi1>
    %c1_i32_110 = arith.constant 1 : i32
    %261 = vector.broadcast %c1_i32_110 : i32 to vector<1x512xi32>
    %262 = arith.addi %2, %261 : vector<1x512xi32>
    %c16_i32_111 = arith.constant 16 : i32
    %263 = vector.broadcast %c16_i32_111 : i32 to vector<1x512xi32>
    %264 = arith.cmpi slt, %262, %263 : vector<1x512xi32>
    %265 = arith.andi %260, %264 : vector<1x512xi1>
    %266 = vector.extract_strided_slice %29 {offsets = [0, 17], sizes = [4, 495], strides = [1, 1]} : vector<4x512xf32> to vector<4x495xf32>
    %267 = vector.extract_strided_slice %29 {offsets = [0, 0], sizes = [4, 17], strides = [1, 1]} : vector<4x512xf32> to vector<4x17xf32>
    %268 = tpu.concatenate %266, %267 in 1 : vector<4x495xf32>, vector<4x17xf32> -> vector<4x512xf32>
    %cst_112 = arith.constant 0.000000e+00 : f32
    %269 = vector.shape_cast %265 : vector<1x512xi1> to vector<1x512xi1>
    %270 = vector.broadcast %269 : vector<1x512xi1> to vector<4x512xi1>
    %271 = vector.broadcast %cst_112 : f32 to vector<4x512xf32>
    %272 = arith.select %270, %268, %271 : vector<4x512xi1>, vector<4x512xf32>
    %cst_113 = arith.constant dense<0.000000e+00> : vector<4x512xf32>
    %273 = tpu.matmul %246, %272, %cst_113 {dimension_numbers = #tpu.dot_dimension_numbers<[1], [0], [0], [1], [0, 0, 1, 1], [], []>} : vector<4x4xf32>, vector<4x512xf32>, vector<4x512xf32> -> vector<4x512xf32>
    %274 = arith.addf %244, %273 : vector<4x512xf32>
    %c0_114 = arith.constant 0 : index
    %c0_115 = arith.constant 0 : index
    %275 = vector.load %arg5[%c0_114, %c0_115] : memref<4x2xf32, #tpu.memory_space<vmem>>, vector<4x1xf32>
    %c0_116 = arith.constant 0 : index
    %c1_117 = arith.constant 1 : index
    %276 = vector.load %arg5[%c0_116, %c1_117] : memref<4x2xf32, #tpu.memory_space<vmem>>, vector<4x1xf32>
    %cst_118 = arith.constant dense<0.000000e+00> : vector<4xf32>
    %277 = vector.multi_reduction <add>, %274, %cst_118 [1] : vector<4x512xf32> to vector<4xf32>
    %278 = vector.shape_cast %277 : vector<4xf32> to vector<4x1xf32>
    %cst_119 = arith.constant 5.120000e+02 : f32
    %279 = vector.broadcast %cst_119 : f32 to vector<4x1xf32>
    %280 = arith.divf %278, %279 : vector<4x1xf32>
    %281 = vector.broadcast %280 : vector<4x1xf32> to vector<4x512xf32>
    %282 = arith.subf %274, %281 : vector<4x512xf32>
    %283 = arith.mulf %282, %282 : vector<4x512xf32>
    %cst_120 = arith.constant dense<0.000000e+00> : vector<4xf32>
    %284 = vector.multi_reduction <add>, %283, %cst_120 [1] : vector<4x512xf32> to vector<4xf32>
    %285 = vector.shape_cast %284 : vector<4xf32> to vector<4x1xf32>
    %cst_121 = arith.constant 5.120000e+02 : f32
    %286 = vector.broadcast %cst_121 : f32 to vector<4x1xf32>
    %287 = arith.divf %285, %286 : vector<4x1xf32>
    %cst_122 = arith.constant 9.99999974E-6 : f32
    %288 = vector.broadcast %cst_122 : f32 to vector<4x1xf32>
    %289 = arith.addf %287, %288 : vector<4x1xf32>
    %290 = math.rsqrt %289 : vector<4x1xf32>
    %291 = arith.mulf %275, %290 : vector<4x1xf32>
    %292 = arith.mulf %280, %291 : vector<4x1xf32>
    %293 = arith.subf %276, %292 : vector<4x1xf32>
    %294 = vector.broadcast %291 : vector<4x1xf32> to vector<4x512xf32>
    %295 = arith.mulf %274, %294 : vector<4x512xf32>
    %296 = vector.broadcast %293 : vector<4x1xf32> to vector<4x512xf32>
    %297 = arith.addf %295, %296 : vector<4x512xf32>
    %cst_123 = arith.constant 0.000000e+00 : f32
    %298 = vector.broadcast %cst_123 : f32 to vector<4x512xf32>
    %299 = arith.maximumf %297, %298 : vector<4x512xf32>
    %c0_124 = arith.constant 0 : index
    %c0_125 = arith.constant 0 : index
    %300 = vector.load %arg3[%c0_124, %c0_125] : memref<16x4xf32, #tpu.memory_space<vmem>>, vector<16x4xf32>
    %cst_126 = arith.constant dense<0.000000e+00> : vector<16x512xf32>
    %301 = tpu.matmul %300, %299, %cst_126 {dimension_numbers = #tpu.dot_dimension_numbers<[1], [0], [0], [1], [0, 0, 1, 1], [], []>} : vector<16x4xf32>, vector<4x512xf32>, vector<16x512xf32> -> vector<16x512xf32>
    %c0_127 = arith.constant 0 : index
    %c0_128 = arith.constant 0 : index
    %302 = vector.load %arg6[%c0_127, %c0_128] : memref<16x2xf32, #tpu.memory_space<vmem>>, vector<16x1xf32>
    %c0_129 = arith.constant 0 : index
    %c1_130 = arith.constant 1 : index
    %303 = vector.load %arg6[%c0_129, %c1_130] : memref<16x2xf32, #tpu.memory_space<vmem>>, vector<16x1xf32>
    %cst_131 = arith.constant dense<0.000000e+00> : vector<16xf32>
    %304 = vector.multi_reduction <add>, %301, %cst_131 [1] : vector<16x512xf32> to vector<16xf32>
    %305 = vector.shape_cast %304 : vector<16xf32> to vector<16x1xf32>
    %cst_132 = arith.constant 5.120000e+02 : f32
    %306 = vector.broadcast %cst_132 : f32 to vector<16x1xf32>
    %307 = arith.divf %305, %306 : vector<16x1xf32>
    %308 = vector.broadcast %307 : vector<16x1xf32> to vector<16x512xf32>
    %309 = arith.subf %301, %308 : vector<16x512xf32>
    %310 = arith.mulf %309, %309 : vector<16x512xf32>
    %cst_133 = arith.constant dense<0.000000e+00> : vector<16xf32>
    %311 = vector.multi_reduction <add>, %310, %cst_133 [1] : vector<16x512xf32> to vector<16xf32>
    %312 = vector.shape_cast %311 : vector<16xf32> to vector<16x1xf32>
    %cst_134 = arith.constant 5.120000e+02 : f32
    %313 = vector.broadcast %cst_134 : f32 to vector<16x1xf32>
    %314 = arith.divf %312, %313 : vector<16x1xf32>
    %cst_135 = arith.constant 9.99999974E-6 : f32
    %315 = vector.broadcast %cst_135 : f32 to vector<16x1xf32>
    %316 = arith.addf %314, %315 : vector<16x1xf32>
    %317 = math.rsqrt %316 : vector<16x1xf32>
    %318 = arith.mulf %302, %317 : vector<16x1xf32>
    %319 = arith.mulf %307, %318 : vector<16x1xf32>
    %320 = arith.subf %303, %319 : vector<16x1xf32>
    %321 = vector.broadcast %318 : vector<16x1xf32> to vector<16x512xf32>
    %322 = arith.mulf %301, %321 : vector<16x512xf32>
    %323 = vector.broadcast %320 : vector<16x1xf32> to vector<16x512xf32>
    %324 = arith.addf %322, %323 : vector<16x512xf32>
    %325 = arith.addf %324, %0 : vector<16x512xf32>
    %cst_136 = arith.constant 0.000000e+00 : f32
    %326 = vector.broadcast %cst_136 : f32 to vector<16x512xf32>
    %327 = arith.maximumf %325, %326 : vector<16x512xf32>
    %c0_137 = arith.constant 0 : index
    %c0_138 = arith.constant 0 : index
    %328 = vector.load %arg9[%c0_137, %c0_138] : memref<16x512xf32, #tpu.memory_space<vmem>>, vector<16x512xf32>
    tpu.vector_store %arg9[%c0_137, %c0_138], %327 {strides = array<i32>} : memref<16x512xf32, #tpu.memory_space<vmem>>, vector<16x512xf32>,
    return
  }
}

</mosaic_0001>

<llo_original>
// kernel: tpu_custom_call.1
$region0: #{tpu_custom_call.1}
  #allocation0 [shape = 'u32[]', space=smem, size = 0x4, offset = 0x4, fixed_abs, tag = 'smem constant byte address 0x4 - core index']
  #allocation1 [shape = 'u32[144,128]{1,0:T(1,128)}', space=vmem, size = 0x12000, scoped, tag = 'internal scratch']
  %s0 = inlined_call_operand.vmem [shape: f32[16,512], index: 0, kind: input, shape index: {}]
  %s1 = inlined_call_operand.vmem [shape: f32[4,16], index: 1, kind: input, shape index: {}]
  %s2 = inlined_call_operand.vmem [shape: f32[9,4,4], index: 2, kind: input, shape index: {}]
  %s3 = inlined_call_operand.vmem [shape: f32[16,4], index: 3, kind: input, shape index: {}]
  %s4 = inlined_call_operand.vmem [shape: f32[4,2], index: 4, kind: input, shape index: {}]
  %s5 = inlined_call_operand.vmem [shape: f32[4,2], index: 5, kind: input, shape index: {}]
  %s6 = inlined_call_operand.vmem [shape: f32[16,2], index: 6, kind: input, shape index: {}]
  %s7 = inlined_call_operand.vmem [shape: s32[1,512], index: 7, kind: input, shape index: {}]
  %s8 = inlined_call_operand.vmem [shape: s32[1,512], index: 8, kind: input, shape index: {}]
  %s9 = inlined_call_operand.hbm [shape: f32[16,512], index: 9, kind: output, shape index: {}]
  %s10 = sld [smem:[#allocation0]]
  $region46: #{tpu_custom_call.1} parent=0
    _
  %s12 = ssub.s32 1, %s10
  %s13 = scalar_select 0, %s12, %s10
  $region1: #{tpu_custom_call.1} parent=0
    #allocation2 [shape = 'u8[32768]{0}', space=vmem, size = 0x8000, scoped, tag = 'output window, operand 0, single buffered']
    #allocation3 [shape = 's32[1]{0}', space=sflag, size = 0x4, scoped, tag = 'scoped memory for tpu_custom_call.1']
    %14 = vsyncpa [#allocation3], 0
    // Predicated region
    $region2: #{tpu_custom_call.1} parent=1 // pred_check
      _
    $region3: #{tpu_custom_call.1} parent=1 // pred_check_branch
      %16 = sbr.rel (0) target = $region5
    $region4: #{tpu_custom_call.1} parent=1 // pred_region
      _
    $region5: #{tpu_custom_call.1} parent=1 // pred_fallthru
      _
    // Predicated region
    $region6: #{tpu_custom_call.1} parent=1 // pred_check
      _
    $region7: #{tpu_custom_call.1} parent=1 // pred_check_branch
      %18 = sbr.rel (0) target = $region9
    $region8: #{tpu_custom_call.1} parent=1 // pred_region
      _
    $region9: #{tpu_custom_call.1} parent=1 // pred_fallthru
      _
    // Predicated region
    $region10: #{tpu_custom_call.1} parent=1 // pred_check
      _
    $region11: #{tpu_custom_call.1} parent=1 // pred_check_branch
      %20 = sbr.rel (0) target = $region13
    $region12: #{tpu_custom_call.1} parent=1 // pred_region
      _
    $region13: #{tpu_custom_call.1} parent=1 // pred_fallthru
      _
    // Predicated region
    $region14: #{tpu_custom_call.1} parent=1 // pred_check
      _
    $region15: #{tpu_custom_call.1} parent=1 // pred_check_branch
      %22 = sbr.rel (0) target = $region17
    $region16: #{tpu_custom_call.1} parent=1 // pred_region
      _
    $region17: #{tpu_custom_call.1} parent=1 // pred_fallthru
      _
    // Predicated region
    $region18: #{tpu_custom_call.1} parent=1 // pred_check
      _
    $region19: #{tpu_custom_call.1} parent=1 // pred_check_branch
      %24 = sbr.rel (0) target = $region21
    $region20: #{tpu_custom_call.1} parent=1 // pred_region
      _
    $region21: #{tpu_custom_call.1} parent=1 // pred_fallthru
      _
    // Predicated region
    $region22: #{tpu_custom_call.1} parent=1 // pred_check
      _
    $region23: #{tpu_custom_call.1} parent=1 // pred_check_branch
      %26 = sbr.rel (0) target = $region25
    $region24: #{tpu_custom_call.1} parent=1 // pred_region
      _
    $region25: #{tpu_custom_call.1} parent=1 // pred_fallthru
      _
    // Predicated region
    $region26: #{tpu_custom_call.1} parent=1 // pred_check
      _
    $region27: #{tpu_custom_call.1} parent=1 // pred_check_branch
      %28 = sbr.rel (0) target = $region29
    $region28: #{tpu_custom_call.1} parent=1 // pred_region
      _
    $region29: #{tpu_custom_call.1} parent=1 // pred_fallthru
      _
    // Predicated region
    $region30: #{tpu_custom_call.1} parent=1 // pred_check
      _
    $region31: #{tpu_custom_call.1} parent=1 // pred_check_branch
      %30 = sbr.rel (0) target = $region33
    $region32: #{tpu_custom_call.1} parent=1 // pred_region
      _
    $region33: #{tpu_custom_call.1} parent=1 // pred_fallthru
      _
    // Predicated region
    $region34: #{tpu_custom_call.1} parent=1 // pred_check
      _
    $region35: #{tpu_custom_call.1} parent=1 // pred_check_branch
      %32 = sbr.rel (0) target = $region37
    $region36: #{tpu_custom_call.1} parent=1 // pred_region
      _
    $region37: #{tpu_custom_call.1} parent=1 // pred_fallthru
      _
    %v33 = vld [vmem:[%s0] sm:$0xff]
    %v34 = vld [vmem:[%s0 + $0x8] sm:$0xff]
    %v35 = vld [vmem:[%s0 + $0x10] sm:$0xff]
    %v36 = vld [vmem:[%s0 + $0x18] sm:$0xff]
    %v37 = vld [vmem:[%s0 + $0x20] sm:$0xff]
    %v38 = vld [vmem:[%s0 + $0x28] sm:$0xff]
    %v39 = vld [vmem:[%s0 + $0x30] sm:$0xff]
    %v40 = vld [vmem:[%s0 + $0x38] sm:$0xff]
    %v41 = vld [vmem:[%s7] sm:$0xf]
    %v42 = vld [vmem:[%s8] sm:$0xf]
    %v43 = vld [vmem:[%s1] sm:$0xf]
    %vm44 = vcmask 130048
    %v46 = vsel %vm44, %v43, 0
    %48 = vmatprep.subr.mxu0 0.0
    %49 = vmatpush1.msra.mxu0 0.0
    %50 = vmatprep.subr.mxu0 0.0
    %51 = vmatpush1.msra.mxu0 0.0
    %52 = vmatprep.subr.mxu0 0.0
    %53 = vmatpush1.msra.mxu0 0.0
    %54 = vmatprep.subr.mxu0 0.0
    %55 = vmatpush1.msra.mxu0 0.0
    %56 = vmatprep.subr.mxu0 0.0
    %57 = vmatpush1.msra.mxu0 0.0
    %58 = vmatprep.subr.mxu0 0.0
    %59 = vmatpush1.msra.mxu0 0.0
    %60 = vmatprep.subr.mxu0 0.0
    %61 = vmatpush1.msra.mxu0 0.0
    %62 = vmatprep.subr.mxu0 0.0
    %63 = vmatpush1.msra.mxu0 0.0
    %64 = vmatprep.subr.mxu0 0.0
    %65 = vmatpush1.msra.mxu0 0.0
    %66 = vmatprep.subr.mxu0 0.0
    %67 = vmatpush1.msra.mxu0 0.0
    %68 = vmatprep.subr.mxu0 0.0
    %69 = vmatpush1.msra.mxu0 0.0
    %70 = vmatprep.subr.mxu0 0.0
    %71 = vmatpush1.msra.mxu0 0.0
    %72 = vmatprep.subr.mxu0 0.0
    %73 = vmatpush1.msra.mxu0 0.0
    %74 = vmatprep.subr.mxu0 0.0
    %75 = vmatpush1.msra.mxu0 0.0
    %76 = vmatprep.subr.mxu0 %v38
    %77 = vmatpush1.msra.mxu0 %v37
    %78 = vmatprep.subr.mxu0 %v34
    %79 = vmatpush1.msra.mxu0 %v33
    %80 = vmatprep.subr.mxu0 0.0
    %81 = vmatpush2.msra.mxu0 0.0
    %82 = vmatprep.subr.mxu0 0.0
    %83 = vmatpush2.msra.mxu0 0.0
    %84 = vmatprep.subr.mxu0 0.0
    %85 = vmatpush2.msra.mxu0 0.0
    %86 = vmatprep.subr.mxu0 0.0
    %87 = vmatpush2.msra.mxu0 0.0
    %88 = vmatprep.subr.mxu0 0.0
    %89 = vmatpush2.msra.mxu0 0.0
    %90 = vmatprep.subr.mxu0 0.0
    %91 = vmatpush2.msra.mxu0 0.0
    %92 = vmatprep.subr.mxu0 0.0
    %93 = vmatpush2.msra.mxu0 0.0
    %94 = vmatprep.subr.mxu0 0.0
    %95 = vmatpush2.msra.mxu0 0.0
    %96 = vmatprep.subr.mxu0 0.0
    %97 = vmatpush2.msra.mxu0 0.0
    %98 = vmatprep.subr.mxu0 0.0
    %99 = vmatpush2.msra.mxu0 0.0
    %100 = vmatprep.subr.mxu0 0.0
    %101 = vmatpush2.msra.mxu0 0.0
    %102 = vmatprep.subr.mxu0 0.0
    %103 = vmatpush2.msra.mxu0 0.0
    %104 = vmatprep.subr.mxu0 0.0
    %105 = vmatpush2.msra.mxu0 0.0
    %106 = vmatprep.subr.mxu0 0.0
    %107 = vmatpush2.msra.mxu0 0.0
    %108 = vmatprep.subr.mxu0 0.0
    %109 = vmatpush2.msra.mxu0 0.0
    %110 = vmatprep.subr.mxu0 0.0
    %111 = vmatpush2.msra.mxu0 0.0
    %112 = vmatprep.mubr.f32.mxu0 0.0
    %113 = vmatmul.mubr.f32.gmra.mxu0 %v46
    %v114 = vpop.f32.mrf.mxu0
    %v115 = vadd.f32 0.0, %v114
    %v116 = vpop.f32.mrf.mxu0
    %v117 = vadd.f32 0.0, %v116
    %118 = vdwg.mxu0
    %119 = vmatprep.subr.mxu0 0.0
    %120 = vmatpush1.msra.mxu0 0.0
    %121 = vmatprep.subr.mxu0 0.0
    %122 = vmatpush1.msra.mxu0 0.0
    %123 = vmatprep.subr.mxu0 0.0
    %124 = vmatpush1.msra.mxu0 0.0
    %125 = vmatprep.subr.mxu0 0.0
    %126 = vmatpush1.msra.mxu0 0.0
    %127 = vmatprep.subr.mxu0 0.0
    %128 = vmatpush1.msra.mxu0 0.0
    %129 = vmatprep.subr.mxu0 0.0
    %130 = vmatpush1.msra.mxu0 0.0
    %131 = vmatprep.subr.mxu0 0.0
    %132 = vmatpush1.msra.mxu0 0.0
    %133 = vmatprep.subr.mxu0 0.0
    %134 = vmatpush1.msra.mxu0 0.0
    %135 = vmatprep.subr.mxu0 0.0
    %136 = vmatpush1.msra.mxu0 0.0
    %137 = vmatprep.subr.mxu0 0.0
    %138 = vmatpush1.msra.mxu0 0.0
    %139 = vmatprep.subr.mxu0 0.0
    %140 = vmatpush1.msra.mxu0 0.0
    %141 = vmatprep.subr.mxu0 0.0
    %142 = vmatpush1.msra.mxu0 0.0
    %143 = vmatprep.subr.mxu0 0.0
    %144 = vmatpush1.msra.mxu0 0.0
    %145 = vmatprep.subr.mxu0 0.0
    %146 = vmatpush1.msra.mxu0 0.0
    %147 = vmatprep.subr.mxu0 %v40
    %148 = vmatpush1.msra.mxu0 %v39
    %149 = vmatprep.subr.mxu0 %v36
    %150 = vmatpush1.msra.mxu0 %v35
    %151 = vmatprep.subr.mxu0 0.0
    %152 = vmatpush2.msra.mxu0 0.0
    %153 = vmatprep.subr.mxu0 0.0
    %154 = vmatpush2.msra.mxu0 0.0
    %155 = vmatprep.subr.mxu0 0.0
    %156 = vmatpush2.msra.mxu0 0.0
    %157 = vmatprep.subr.mxu0 0.0
    %158 = vmatpush2.msra.mxu0 0.0
    %159 = vmatprep.subr.mxu0 0.0
    %160 = vmatpush2.msra.mxu0 0.0
    %161 = vmatprep.subr.mxu0 0.0
    %162 = vmatpush2.msra.mxu0 0.0
    %163 = vmatprep.subr.mxu0 0.0
    %164 = vmatpush2.msra.mxu0 0.0
    %165 = vmatprep.subr.mxu0 0.0
    %166 = vmatpush2.msra.mxu0 0.0
    %167 = vmatprep.subr.mxu0 0.0
    %168 = vmatpush2.msra.mxu0 0.0
    %169 = vmatprep.subr.mxu0 0.0
    %170 = vmatpush2.msra.mxu0 0.0
    %171 = vmatprep.subr.mxu0 0.0
    %172 = vmatpush2.msra.mxu0 0.0
    %173 = vmatprep.subr.mxu0 0.0
    %174 = vmatpush2.msra.mxu0 0.0
    %175 = vmatprep.subr.mxu0 0.0
    %176 = vmatpush2.msra.mxu0 0.0
    %177 = vmatprep.subr.mxu0 0.0
    %178 = vmatpush2.msra.mxu0 0.0
    %179 = vmatprep.subr.mxu0 0.0
    %180 = vmatpush2.msra.mxu0 0.0
    %181 = vmatprep.subr.mxu0 0.0
    %182 = vmatpush2.msra.mxu0 0.0
    %183 = vmatprep.mubr.f32.mxu0 0.0
    %184 = vmatmul.mubr.f32.gmra.mxu0 %v46
    %v185 = vpop.f32.mrf.mxu0
    %v186 = vadd.f32 0.0, %v185
    %v187 = vpop.f32.mrf.mxu0
    %v188 = vadd.f32 0.0, %v187
    %189 = vdwg.mxu0
    %v190 = vld [vmem:[%s4] sm:$0xf]
    %vm191 = vcmask 1043456
    %v192 = vsel %vm191, %v115, 0.0
    %v193 = vsel %vm191, %v117, 0.0
    %v194 = vadd.f32 %v192, %v193
    %v195 = vsel %vm191, %v186, 0.0
    %v196 = vadd.f32 %v194, %v195
    %v197 = vsel %vm191, %v188, 0.0
    %v198 = vadd.f32 %v196, %v197
    %199 = vadd.xlane.f32.xlu0 %v198
    %v200 = vpop.xlane.xlu0 %199
    %v201 = vrcp.pop 512.0
    %v202 = vmul.f32 %v200, %v201
    %v203 = vsub.f32 %v115, %v202
    %v204 = vsub.f32 %v117, %v202
    %v205 = vsub.f32 %v186, %v202
    %v206 = vsub.f32 %v188, %v202
    %v207 = vmul.f32 %v203, %v203
    %v208 = vmul.f32 %v204, %v204
    %v209 = vmul.f32 %v205, %v205
    %v210 = vmul.f32 %v206, %v206
    %v211 = vsel %vm191, %v207, 0.0
    %v212 = vsel %vm191, %v208, 0.0
    %v213 = vadd.f32 %v211, %v212
    %v214 = vsel %vm191, %v209, 0.0
    %v215 = vadd.f32 %v213, %v214
    %v216 = vsel %vm191, %v210, 0.0
    %v217 = vadd.f32 %v215, %v216
    %218 = vadd.xlane.f32.xlu0 %v217
    %v219 = vpop.xlane.xlu0 %218
    %v220 = vmul.f32 %v219, %v201
    %v221 = vadd.f32 %v220, 1e-05
    %v222 = vrsqrt.pop %v221
    %v223 = vmul.f32 %v190, %v222
    %v224 = vmul.f32 %v202, %v223
    %226 = vrot.lane.b32.xlu0 %v224, 1
    %v227 = vpop.permute.xlu0 %226
    %v229 = vsub.f32 %v190, %v227
    %231 = vset.pattern.permute.xlu0 0
    %232 = vperm.xlu0 %231, %v223
    %v233 = vpop.permute.xlu0 %232
    %v235 = vmul.f32 %v115, %v233
    %v236 = vmul.f32 %v117, %v233
    %v237 = vmul.f32 %v186, %v233
    %v238 = vmul.f32 %v188, %v233
    %240 = vset.pattern.permute.xlu0 1
    %241 = vperm.xlu0 %240, %v229
    %v242 = vpop.permute.xlu0 %241
    %v244 = vadd.f32 %v235, %v242
    %v245 = vadd.f32 %v236, %v242
    %v246 = vadd.f32 %v237, %v242
    %v247 = vadd.f32 %v238, %v242
    %v248 = vmax.f32 %v244, 0.0
    %v249 = vmax.f32 %v245, 0.0
    %v250 = vmax.f32 %v246, 0.0
    %v251 = vmax.f32 %v247, 0.0
    %v252 = vld [vmem:[%s2] sm:$0xf]
    %v253 = vadd.s32 %v41, 4294967295
    %vm254 = vcmp.ge.s32.totalorder %v253, 0
    %vm255 = vcmp.lt.s32.totalorder %v253, 16
    %vm256 = vmand %vm254, %vm255
    %v257 = vadd.s32 %v42, 4294967295
    %vm258 = vcmp.ge.s32.totalorder %v257, 0
    %vm259 = vmand %vm256, %vm258
    %vm260 = vcmp.lt.s32.totalorder %v257, 16
    %vm261 = vmand %vm259, %vm260
    %263 = vrot.lane.b32.xlu0 %v251, 17
    %v264 = vpop.permute.xlu0 %263
    %269 = vrot.lane.b32.xlu0 %v248, 17
    %v270 = vpop.permute.xlu0 %269
    %271 = vrot.lane.b32.xlu0 %v249, 17
    %v272 = vpop.permute.xlu0 %271
    %273 = vrot.lane.b32.xlu0 %v250, 17
    %v274 = vpop.permute.xlu0 %273
    %vm275 = vcmask 138240
    %v276 = vsel %vm275, %v270, %v272
    %v277 = vsel %vm275, %v272, %v274
    %v278 = vsel %vm275, %v274, %v264
    %v283 = vsel %vm275, %v264, %v270
    %v284 = vsel %vm261, 1, 0
    %v285 = vlaneseq
    %v286 = vshrl.u32 %v285, 7
    %v287 = vsub.s32 0, %v286
    %v288 = vrot.slane %v284, %v287
    %v289 = vlaneseq
    %v290 = vshrl.u32 %v289, 7
    %v291 = vsub.s32 1, %v290
    %v292 = vrot.slane %v284, %v291
    %v293 = vlaneseq
    %v294 = vshrl.u32 %v293, 7
    %v295 = vsub.s32 2, %v294
    %v296 = vrot.slane %v284, %v295
    %v297 = vlaneseq
    %v298 = vshrl.u32 %v297, 7
    %v299 = vsub.s32 3, %v298
    %v300 = vrot.slane %v284, %v299
    %vm301 = vcmp.eq.s32.totalorder %v288, 1
    %vm302 = vcmp.eq.s32.totalorder %v292, 1
    %vm303 = vcmp.eq.s32.totalorder %v296, 1
    %vm304 = vcmp.eq.s32.totalorder %v300, 1
    %v305 = vsel %vm301, %v283, 0.0
    %v306 = vsel %vm302, %v276, 0.0
    %v307 = vsel %vm303, %v277, 0.0
    %v308 = vsel %vm304, %v278, 0.0
    %s309 = scalar_lea.vmem %s2, 4
    %v310 = vld [vmem:[%s309] sm:$0xf]
    %vm311 = vcmp.ge.s32.totalorder %v42, 0
    %vm312 = vmand %vm256, %vm311
    %vm313 = vcmp.lt.s32.totalorder %v42, 16
    %vm314 = vmand %vm312, %vm313
    %315 = vrot.lane.b32.xlu0 %v251, 16
    %v316 = vpop.permute.xlu0 %315
    %318 = vrot.lane.b32.xlu0 %v248, 16
    %v319 = vpop.permute.xlu0 %318
    %320 = vrot.lane.b32.xlu0 %v249, 16
    %v321 = vpop.permute.xlu0 %320
    %322 = vrot.lane.b32.xlu0 %v250, 16
    %v323 = vpop.permute.xlu0 %322
    %v324 = vsel %vm44, %v319, %v321
    %v325 = vsel %vm44, %v321, %v323
    %v326 = vsel %vm44, %v323, %v316
    %v331 = vsel %vm44, %v316, %v319
    %v332 = vsel %vm314, 1, 0
    %v333 = vlaneseq
    %v334 = vshrl.u32 %v333, 7
    %v335 = vsub.s32 0, %v334
    %v336 = vrot.slane %v332, %v335
    %v337 = vlaneseq
    %v338 = vshrl.u32 %v337, 7
    %v339 = vsub.s32 1, %v338
    %v340 = vrot.slane %v332, %v339
    %v341 = vlaneseq
    %v342 = vshrl.u32 %v341, 7
    %v343 = vsub.s32 2, %v342
    %v344 = vrot.slane %v332, %v343
    %v345 = vlaneseq
    %v346 = vshrl.u32 %v345, 7
    %v347 = vsub.s32 3, %v346
    %v348 = vrot.slane %v332, %v347
    %vm349 = vcmp.eq.s32.totalorder %v336, 1
    %vm350 = vcmp.eq.s32.totalorder %v340, 1
    %vm351 = vcmp.eq.s32.totalorder %v344, 1
    %vm352 = vcmp.eq.s32.totalorder %v348, 1
    %v353 = vsel %vm349, %v331, 0.0
    %v354 = vsel %vm350, %v324, 0.0
    %v355 = vsel %vm351, %v325, 0.0
    %v356 = vsel %vm352, %v326, 0.0
    %vm357 = vcmask 31744
    %v359 = vsel %vm357, %v310, 0
    %v362 = vsel %vm191, %v353, 0
    %v365 = vsel %vm191, %v354, 0
    %v368 = vsel %vm191, %v355, 0
    %v371 = vsel %vm191, %v356, 0
    %373 = vmatprep.subr.mxu0 0.0
    %374 = vmatpush1.msra.mxu0 0.0
    %375 = vmatprep.subr.mxu0 0.0
    %376 = vmatpush1.msra.mxu0 0.0
    %377 = vmatprep.subr.mxu0 0.0
    %378 = vmatpush1.msra.mxu0 0.0
    %379 = vmatprep.subr.mxu0 0.0
    %380 = vmatpush1.msra.mxu0 0.0
    %381 = vmatprep.subr.mxu0 0.0
    %382 = vmatpush1.msra.mxu0 0.0
    %383 = vmatprep.subr.mxu0 0.0
    %384 = vmatpush1.msra.mxu0 0.0
    %385 = vmatprep.subr.mxu0 0.0
    %386 = vmatpush1.msra.mxu0 0.0
    %387 = vmatprep.subr.mxu0 0.0
    %388 = vmatpush1.msra.mxu0 0.0
    %389 = vmatprep.subr.mxu0 0.0
    %390 = vmatpush1.msra.mxu0 0.0
    %391 = vmatprep.subr.mxu0 0.0
    %392 = vmatpush1.msra.mxu0 0.0
    %393 = vmatprep.subr.mxu0 0.0
    %394 = vmatpush1.msra.mxu0 0.0
    %395 = vmatprep.subr.mxu0 0.0
    %396 = vmatpush1.msra.mxu0 0.0
    %397 = vmatprep.subr.mxu0 0.0
    %398 = vmatpush1.msra.mxu0 0.0
    %399 = vmatprep.subr.mxu0 0.0
    %400 = vmatpush1.msra.mxu0 0.0
    %401 = vmatprep.subr.mxu0 0.0
    %402 = vmatpush1.msra.mxu0 0.0
    %403 = vmatprep.subr.mxu0 %v365
    %404 = vmatpush1.msra.mxu0 %v362
    %405 = vmatprep.subr.mxu0 0.0
    %406 = vmatpush2.msra.mxu0 0.0
    %407 = vmatprep.subr.mxu0 0.0
    %408 = vmatpush2.msra.mxu0 0.0
    %409 = vmatprep.subr.mxu0 0.0
    %410 = vmatpush2.msra.mxu0 0.0
    %411 = vmatprep.subr.mxu0 0.0
    %412 = vmatpush2.msra.mxu0 0.0
    %413 = vmatprep.subr.mxu0 0.0
    %414 = vmatpush2.msra.mxu0 0.0
    %415 = vmatprep.subr.mxu0 0.0
    %416 = vmatpush2.msra.mxu0 0.0
    %417 = vmatprep.subr.mxu0 0.0
    %418 = vmatpush2.msra.mxu0 0.0
    %419 = vmatprep.subr.mxu0 0.0
    %420 = vmatpush2.msra.mxu0 0.0
    %421 = vmatprep.subr.mxu0 0.0
    %422 = vmatpush2.msra.mxu0 0.0
    %423 = vmatprep.subr.mxu0 0.0
    %424 = vmatpush2.msra.mxu0 0.0
    %425 = vmatprep.subr.mxu0 0.0
    %426 = vmatpush2.msra.mxu0 0.0
    %427 = vmatprep.subr.mxu0 0.0
    %428 = vmatpush2.msra.mxu0 0.0
    %429 = vmatprep.subr.mxu0 0.0
    %430 = vmatpush2.msra.mxu0 0.0
    %431 = vmatprep.subr.mxu0 0.0
    %432 = vmatpush2.msra.mxu0 0.0
    %433 = vmatprep.subr.mxu0 0.0
    %434 = vmatpush2.msra.mxu0 0.0
    %435 = vmatprep.subr.mxu0 0.0
    %436 = vmatpush2.msra.mxu0 0.0
    %437 = vmatprep.mubr.f32.mxu0 0.0
    %438 = vmatmul.mubr.f32.gmra.mxu0 %v359
    %v439 = vpop.f32.mrf.mxu0
    %v440 = vadd.f32 0.0, %v439
    %v441 = vpop.f32.mrf.mxu0
    %v442 = vadd.f32 0.0, %v441
    %443 = vdwg.mxu0
    %444 = vmatprep.subr.mxu0 0.0
    %445 = vmatpush1.msra.mxu0 0.0
    %446 = vmatprep.subr.mxu0 0.0
    %447 = vmatpush1.msra.mxu0 0.0
    %448 = vmatprep.subr.mxu0 0.0
    %449 = vmatpush1.msra.mxu0 0.0
    %450 = vmatprep.subr.mxu0 0.0
    %451 = vmatpush1.msra.mxu0 0.0
    %452 = vmatprep.subr.mxu0 0.0
    %453 = vmatpush1.msra.mxu0 0.0
    %454 = vmatprep.subr.mxu0 0.0
    %455 = vmatpush1.msra.mxu0 0.0
    %456 = vmatprep.subr.mxu0 0.0
    %457 = vmatpush1.msra.mxu0 0.0
    %458 = vmatprep.subr.mxu0 0.0
    %459 = vmatpush1.msra.mxu0 0.0
    %460 = vmatprep.subr.mxu0 0.0
    %461 = vmatpush1.msra.mxu0 0.0
    %462 = vmatprep.subr.mxu0 0.0
    %463 = vmatpush1.msra.mxu0 0.0
    %464 = vmatprep.subr.mxu0 0.0
    %465 = vmatpush1.msra.mxu0 0.0
    %466 = vmatprep.subr.mxu0 0.0
    %467 = vmatpush1.msra.mxu0 0.0
    %468 = vmatprep.subr.mxu0 0.0
    %469 = vmatpush1.msra.mxu0 0.0
    %470 = vmatprep.subr.mxu0 0.0
    %471 = vmatpush1.msra.mxu0 0.0
    %472 = vmatprep.subr.mxu0 0.0
    %473 = vmatpush1.msra.mxu0 0.0
    %474 = vmatprep.subr.mxu0 %v371
    %475 = vmatpush1.msra.mxu0 %v368
    %476 = vmatprep.subr.mxu0 0.0
    %477 = vmatpush2.msra.mxu0 0.0
    %478 = vmatprep.subr.mxu0 0.0
    %479 = vmatpush2.msra.mxu0 0.0
    %480 = vmatprep.subr.mxu0 0.0
    %481 = vmatpush2.msra.mxu0 0.0
    %482 = vmatprep.subr.mxu0 0.0
    %483 = vmatpush2.msra.mxu0 0.0
    %484 = vmatprep.subr.mxu0 0.0
    %485 = vmatpush2.msra.mxu0 0.0
    %486 = vmatprep.subr.mxu0 0.0
    %487 = vmatpush2.msra.mxu0 0.0
    %488 = vmatprep.subr.mxu0 0.0
    %489 = vmatpush2.msra.mxu0 0.0
    %490 = vmatprep.subr.mxu0 0.0
    %491 = vmatpush2.msra.mxu0 0.0
    %492 = vmatprep.subr.mxu0 0.0
    %493 = vmatpush2.msra.mxu0 0.0
    %494 = vmatprep.subr.mxu0 0.0
    %495 = vmatpush2.msra.mxu0 0.0
    %496 = vmatprep.subr.mxu0 0.0
    %497 = vmatpush2.msra.mxu0 0.0
    %498 = vmatprep.subr.mxu0 0.0
    %499 = vmatpush2.msra.mxu0 0.0
    %500 = vmatprep.subr.mxu0 0.0
    %501 = vmatpush2.msra.mxu0 0.0
    %502 = vmatprep.subr.mxu0 0.0
    %503 = vmatpush2.msra.mxu0 0.0
    %504 = vmatprep.subr.mxu0 0.0
    %505 = vmatpush2.msra.mxu0 0.0
    %506 = vmatprep.subr.mxu0 0.0
    %507 = vmatpush2.msra.mxu0 0.0
    %508 = vmatprep.mubr.f32.mxu0 0.0
    %509 = vmatmul.mubr.f32.gmra.mxu0 %v359
    %v510 = vpop.f32.mrf.mxu0
    %v511 = vadd.f32 0.0, %v510
    %v512 = vpop.f32.mrf.mxu0
    %v513 = vadd.f32 0.0, %v512
    %514 = vdwg.mxu0
    %v516 = vsel %vm357, %v252, 0
    %v519 = vsel %vm191, %v305, 0
    %v522 = vsel %vm191, %v306, 0
    %v525 = vsel %vm191, %v307, 0
    %v528 = vsel %vm191, %v308, 0
    %530 = vmatprep.subr.mxu0 0.0
    %531 = vmatpush1.msra.mxu0 0.0
    %532 = vmatprep.subr.mxu0 0.0
    %533 = vmatpush1.msra.mxu0 0.0
    %534 = vmatprep.subr.mxu0 0.0
    %535 = vmatpush1.msra.mxu0 0.0
    %536 = vmatprep.subr.mxu0 0.0
    %537 = vmatpush1.msra.mxu0 0.0
    %538 = vmatprep.subr.mxu0 0.0
    %539 = vmatpush1.msra.mxu0 0.0
    %540 = vmatprep.subr.mxu0 0.0
    %541 = vmatpush1.msra.mxu0 0.0
    %542 = vmatprep.subr.mxu0 0.0
    %543 = vmatpush1.msra.mxu0 0.0
    %544 = vmatprep.subr.mxu0 0.0
    %545 = vmatpush1.msra.mxu0 0.0
    %546 = vmatprep.subr.mxu0 0.0
    %547 = vmatpush1.msra.mxu0 0.0
    %548 = vmatprep.subr.mxu0 0.0
    %549 = vmatpush1.msra.mxu0 0.0
    %550 = vmatprep.subr.mxu0 0.0
    %551 = vmatpush1.msra.mxu0 0.0
    %552 = vmatprep.subr.mxu0 0.0
    %553 = vmatpush1.msra.mxu0 0.0
    %554 = vmatprep.subr.mxu0 0.0
    %555 = vmatpush1.msra.mxu0 0.0
    %556 = vmatprep.subr.mxu0 0.0
    %557 = vmatpush1.msra.mxu0 0.0
    %558 = vmatprep.subr.mxu0 0.0
    %559 = vmatpush1.msra.mxu0 0.0
    %560 = vmatprep.subr.mxu0 %v522
    %561 = vmatpush1.msra.mxu0 %v519
    %562 = vmatprep.subr.mxu0 0.0
    %563 = vmatpush2.msra.mxu0 0.0
    %564 = vmatprep.subr.mxu0 0.0
    %565 = vmatpush2.msra.mxu0 0.0
    %566 = vmatprep.subr.mxu0 0.0
    %567 = vmatpush2.msra.mxu0 0.0
    %568 = vmatprep.subr.mxu0 0.0
    %569 = vmatpush2.msra.mxu0 0.0
    %570 = vmatprep.subr.mxu0 0.0
    %571 = vmatpush2.msra.mxu0 0.0
    %572 = vmatprep.subr.mxu0 0.0
    %573 = vmatpush2.msra.mxu0 0.0
    %574 = vmatprep.subr.mxu0 0.0
    %575 = vmatpush2.msra.mxu0 0.0
    %576 = vmatprep.subr.mxu0 0.0
    %577 = vmatpush2.msra.mxu0 0.0
    %578 = vmatprep.subr.mxu0 0.0
    %579 = vmatpush2.msra.mxu0 0.0
    %580 = vmatprep.subr.mxu0 0.0
    %581 = vmatpush2.msra.mxu0 0.0
    %582 = vmatprep.subr.mxu0 0.0
    %583 = vmatpush2.msra.mxu0 0.0
    %584 = vmatprep.subr.mxu0 0.0
    %585 = vmatpush2.msra.mxu0 0.0
    %586 = vmatprep.subr.mxu0 0.0
    %587 = vmatpush2.msra.mxu0 0.0
    %588 = vmatprep.subr.mxu0 0.0
    %589 = vmatpush2.msra.mxu0 0.0
    %590 = vmatprep.subr.mxu0 0.0
    %591 = vmatpush2.msra.mxu0 0.0
    %592 = vmatprep.subr.mxu0 0.0
    %593 = vmatpush2.msra.mxu0 0.0
    %594 = vmatprep.mubr.f32.mxu0 0.0
    %595 = vmatmul.mubr.f32.gmra.mxu0 %v516
    %v596 = vpop.f32.mrf.mxu0
    %v597 = vadd.f32 %v440, %v596
    %v598 = vpop.f32.mrf.mxu0
    %v599 = vadd.f32 %v442, %v598
    %600 = vdwg.mxu0
    %601 = vmatprep.subr.mxu0 0.0
    %602 = vmatpush1.msra.mxu0 0.0
    %603 = vmatprep.subr.mxu0 0.0
    %604 = vmatpush1.msra.mxu0 0.0
    %605 = vmatprep.subr.mxu0 0.0
    %606 = vmatpush1.msra.mxu0 0.0
    %607 = vmatprep.subr.mxu0 0.0
    %608 = vmatpush1.msra.mxu0 0.0
    %609 = vmatprep.subr.mxu0 0.0
    %610 = vmatpush1.msra.mxu0 0.0
    %611 = vmatprep.subr.mxu0 0.0
    %612 = vmatpush1.msra.mxu0 0.0
    %613 = vmatprep.subr.mxu0 0.0
    %614 = vmatpush1.msra.mxu0 0.0
    %615 = vmatprep.subr.mxu0 0.0
    %616 = vmatpush1.msra.mxu0 0.0
    %617 = vmatprep.subr.mxu0 0.0
    %618 = vmatpush1.msra.mxu0 0.0
    %619 = vmatprep.subr.mxu0 0.0
    %620 = vmatpush1.msra.mxu0 0.0
    %621 = vmatprep.subr.mxu0 0.0
    %622 = vmatpush1.msra.mxu0 0.0
    %623 = vmatprep.subr.mxu0 0.0
    %624 = vmatpush1.msra.mxu0 0.0
    %625 = vmatprep.subr.mxu0 0.0
    %626 = vmatpush1.msra.mxu0 0.0
    %627 = vmatprep.subr.mxu0 0.0
    %628 = vmatpush1.msra.mxu0 0.0
    %629 = vmatprep.subr.mxu0 0.0
    %630 = vmatpush1.msra.mxu0 0.0
    %631 = vmatprep.subr.mxu0 %v528
    %632 = vmatpush1.msra.mxu0 %v525
    %633 = vmatprep.subr.mxu0 0.0
    %634 = vmatpush2.msra.mxu0 0.0
    %635 = vmatprep.subr.mxu0 0.0
    %636 = vmatpush2.msra.mxu0 0.0
    %637 = vmatprep.subr.mxu0 0.0
    %638 = vmatpush2.msra.mxu0 0.0
    %639 = vmatprep.subr.mxu0 0.0
    %640 = vmatpush2.msra.mxu0 0.0
    %641 = vmatprep.subr.mxu0 0.0
    %642 = vmatpush2.msra.mxu0 0.0
    %643 = vmatprep.subr.mxu0 0.0
    %644 = vmatpush2.msra.mxu0 0.0
    %645 = vmatprep.subr.mxu0 0.0
    %646 = vmatpush2.msra.mxu0 0.0
    %647 = vmatprep.subr.mxu0 0.0
    %648 = vmatpush2.msra.mxu0 0.0
    %649 = vmatprep.subr.mxu0 0.0
    %650 = vmatpush2.msra.mxu0 0.0
    %651 = vmatprep.subr.mxu0 0.0
    %652 = vmatpush2.msra.mxu0 0.0
    %653 = vmatprep.subr.mxu0 0.0
    %654 = vmatpush2.msra.mxu0 0.0
    %655 = vmatprep.subr.mxu0 0.0
    %656 = vmatpush2.msra.mxu0 0.0
    %657 = vmatprep.subr.mxu0 0.0
    %658 = vmatpush2.msra.mxu0 0.0
    %659 = vmatprep.subr.mxu0 0.0
    %660 = vmatpush2.msra.mxu0 0.0
    %661 = vmatprep.subr.mxu0 0.0
    %662 = vmatpush2.msra.mxu0 0.0
    %663 = vmatprep.subr.mxu0 0.0
    %664 = vmatpush2.msra.mxu0 0.0
    %665 = vmatprep.mubr.f32.mxu0 0.0
    %666 = vmatmul.mubr.f32.gmra.mxu0 %v516
    %v667 = vpop.f32.mrf.mxu0
    %v668 = vadd.f32 %v511, %v667
    %v669 = vpop.f32.mrf.mxu0
    %v670 = vadd.f32 %v513, %v669
    %671 = vdwg.mxu0
    %s672 = scalar_lea.vmem %s2, 8
    %v673 = vld [vmem:[%s672] sm:$0xf]
    %v674 = vadd.s32 %v42, 1
    %vm675 = vcmp.ge.s32.totalorder %v674, 0
    %vm676 = vmand %vm256, %vm675
    %vm677 = vcmp.lt.s32.totalorder %v674, 16
    %vm678 = vmand %vm676, %vm677
    %679 = vrot.lane.b32.xlu0 %v251, 15
    %v680 = vpop.permute.xlu0 %679
    %682 = vrot.lane.b32.xlu0 %v248, 15
    %v683 = vpop.permute.xlu0 %682
    %684 = vrot.lane.b32.xlu0 %v249, 15
    %v685 = vpop.permute.xlu0 %684
    %686 = vrot.lane.b32.xlu0 %v250, 15
    %v687 = vpop.permute.xlu0 %686
    %vm688 = vcmask 121856
    %v689 = vsel %vm688, %v683, %v685
    %v690 = vsel %vm688, %v685, %v687
    %v691 = vsel %vm688, %v687, %v680
    %v696 = vsel %vm688, %v680, %v683
    %v697 = vsel %vm678, 1, 0
    %v698 = vlaneseq
    %v699 = vshrl.u32 %v698, 7
    %v700 = vsub.s32 0, %v699
    %v701 = vrot.slane %v697, %v700
    %v702 = vlaneseq
    %v703 = vshrl.u32 %v702, 7
    %v704 = vsub.s32 1, %v703
    %v705 = vrot.slane %v697, %v704
    %v706 = vlaneseq
    %v707 = vshrl.u32 %v706, 7
    %v708 = vsub.s32 2, %v707
    %v709 = vrot.slane %v697, %v708
    %v710 = vlaneseq
    %v711 = vshrl.u32 %v710, 7
    %v712 = vsub.s32 3, %v711
    %v713 = vrot.slane %v697, %v712
    %vm714 = vcmp.eq.s32.totalorder %v701, 1
    %vm715 = vcmp.eq.s32.totalorder %v705, 1
    %vm716 = vcmp.eq.s32.totalorder %v709, 1
    %vm717 = vcmp.eq.s32.totalorder %v713, 1
    %v718 = vsel %vm714, %v696, 0.0
    %v719 = vsel %vm715, %v689, 0.0
    %v720 = vsel %vm716, %v690, 0.0
    %v721 = vsel %vm717, %v691, 0.0
    %v723 = vsel %vm357, %v673, 0
    %v726 = vsel %vm191, %v718, 0
    %v729 = vsel %vm191, %v719, 0
    %v732 = vsel %vm191, %v720, 0
    %v735 = vsel %vm191, %v721, 0
    %737 = vmatprep.subr.mxu0 0.0
    %738 = vmatpush1.msra.mxu0 0.0
    %739 = vmatprep.subr.mxu0 0.0
    %740 = vmatpush1.msra.mxu0 0.0
    %741 = vmatprep.subr.mxu0 0.0
    %742 = vmatpush1.msra.mxu0 0.0
    %743 = vmatprep.subr.mxu0 0.0
    %744 = vmatpush1.msra.mxu0 0.0
    %745 = vmatprep.subr.mxu0 0.0
    %746 = vmatpush1.msra.mxu0 0.0
    %747 = vmatprep.subr.mxu0 0.0
    %748 = vmatpush1.msra.mxu0 0.0
    %749 = vmatprep.subr.mxu0 0.0
    %750 = vmatpush1.msra.mxu0 0.0
    %751 = vmatprep.subr.mxu0 0.0
    %752 = vmatpush1.msra.mxu0 0.0
    %753 = vmatprep.subr.mxu0 0.0
    %754 = vmatpush1.msra.mxu0 0.0
    %755 = vmatprep.subr.mxu0 0.0
    %756 = vmatpush1.msra.mxu0 0.0
    %757 = vmatprep.subr.mxu0 0.0
    %758 = vmatpush1.msra.mxu0 0.0
    %759 = vmatprep.subr.mxu0 0.0
    %760 = vmatpush1.msra.mxu0 0.0
    %761 = vmatprep.subr.mxu0 0.0
    %762 = vmatpush1.msra.mxu0 0.0
    %763 = vmatprep.subr.mxu0 0.0
    %764 = vmatpush1.msra.mxu0 0.0
    %765 = vmatprep.subr.mxu0 0.0
    %766 = vmatpush1.msra.mxu0 0.0
    %767 = vmatprep.subr.mxu0 %v729
    %768 = vmatpush1.msra.mxu0 %v726
    %769 = vmatprep.subr.mxu0 0.0
    %770 = vmatpush2.msra.mxu0 0.0
    %771 = vmatprep.subr.mxu0 0.0
    %772 = vmatpush2.msra.mxu0 0.0
    %773 = vmatprep.subr.mxu0 0.0
    %774 = vmatpush2.msra.mxu0 0.0
    %775 = vmatprep.subr.mxu0 0.0
    %776 = vmatpush2.msra.mxu0 0.0
    %777 = vmatprep.subr.mxu0 0.0
    %778 = vmatpush2.msra.mxu0 0.0
    %779 = vmatprep.subr.mxu0 0.0
    %780 = vmatpush2.msra.mxu0 0.0
    %781 = vmatprep.subr.mxu0 0.0
    %782 = vmatpush2.msra.mxu0 0.0
    %783 = vmatprep.subr.mxu0 0.0
    %784 = vmatpush2.msra.mxu0 0.0
    %785 = vmatprep.subr.mxu0 0.0
    %786 = vmatpush2.msra.mxu0 0.0
    %787 = vmatprep.subr.mxu0 0.0
    %788 = vmatpush2.msra.mxu0 0.0
    %789 = vmatprep.subr.mxu0 0.0
    %790 = vmatpush2.msra.mxu0 0.0
    %791 = vmatprep.subr.mxu0 0.0
    %792 = vmatpush2.msra.mxu0 0.0
    %793 = vmatprep.subr.mxu0 0.0
    %794 = vmatpush2.msra.mxu0 0.0
    %795 = vmatprep.subr.mxu0 0.0
    %796 = vmatpush2.msra.mxu0 0.0
    %797 = vmatprep.subr.mxu0 0.0
    %798 = vmatpush2.msra.mxu0 0.0
    %799 = vmatprep.subr.mxu0 0.0
    %800 = vmatpush2.msra.mxu0 0.0
    %801 = vmatprep.mubr.f32.mxu0 0.0
    %802 = vmatmul.mubr.f32.gmra.mxu0 %v723
    %v803 = vpop.f32.mrf.mxu0
    %v804 = vadd.f32 0.0, %v803
    %v805 = vpop.f32.mrf.mxu0
    %v806 = vadd.f32 0.0, %v805
    %807 = vdwg.mxu0
    %808 = vmatprep.subr.mxu0 0.0
    %809 = vmatpush1.msra.mxu0 0.0
    %810 = vmatprep.subr.mxu0 0.0
    %811 = vmatpush1.msra.mxu0 0.0
    %812 = vmatprep.subr.mxu0 0.0
    %813 = vmatpush1.msra.mxu0 0.0
    %814 = vmatprep.subr.mxu0 0.0
    %815 = vmatpush1.msra.mxu0 0.0
    %816 = vmatprep.subr.mxu0 0.0
    %817 = vmatpush1.msra.mxu0 0.0
    %818 = vmatprep.subr.mxu0 0.0
    %819 = vmatpush1.msra.mxu0 0.0
    %820 = vmatprep.subr.mxu0 0.0
    %821 = vmatpush1.msra.mxu0 0.0
    %822 = vmatprep.subr.mxu0 0.0
    %823 = vmatpush1.msra.mxu0 0.0
    %824 = vmatprep.subr.mxu0 0.0
    %825 = vmatpush1.msra.mxu0 0.0
    %826 = vmatprep.subr.mxu0 0.0
    %827 = vmatpush1.msra.mxu0 0.0
    %828 = vmatprep.subr.mxu0 0.0
    %829 = vmatpush1.msra.mxu0 0.0
    %830 = vmatprep.subr.mxu0 0.0
    %831 = vmatpush1.msra.mxu0 0.0
    %832 = vmatprep.subr.mxu0 0.0
    %833 = vmatpush1.msra.mxu0 0.0
    %834 = vmatprep.subr.mxu0 0.0
    %835 = vmatpush1.msra.mxu0 0.0
    %836 = vmatprep.subr.mxu0 0.0
    %837 = vmatpush1.msra.mxu0 0.0
    %838 = vmatprep.subr.mxu0 %v735
    %839 = vmatpush1.msra.mxu0 %v732
    %840 = vmatprep.subr.mxu0 0.0
    %841 = vmatpush2.msra.mxu0 0.0
    %842 = vmatprep.subr.mxu0 0.0
    %843 = vmatpush2.msra.mxu0 0.0
    %844 = vmatprep.subr.mxu0 0.0
    %845 = vmatpush2.msra.mxu0 0.0
    %846 = vmatprep.subr.mxu0 0.0
    %847 = vmatpush2.msra.mxu0 0.0
    %848 = vmatprep.subr.mxu0 0.0
    %849 = vmatpush2.msra.mxu0 0.0
    %850 = vmatprep.subr.mxu0 0.0
    %851 = vmatpush2.msra.mxu0 0.0
    %852 = vmatprep.subr.mxu0 0.0
    %853 = vmatpush2.msra.mxu0 0.0
    %854 = vmatprep.subr.mxu0 0.0
    %855 = vmatpush2.msra.mxu0 0.0
    %856 = vmatprep.subr.mxu0 0.0
    %857 = vmatpush2.msra.mxu0 0.0
    %858 = vmatprep.subr.mxu0 0.0
    %859 = vmatpush2.msra.mxu0 0.0
    %860 = vmatprep.subr.mxu0 0.0
    %861 = vmatpush2.msra.mxu0 0.0
    %862 = vmatprep.subr.mxu0 0.0
    %863 = vmatpush2.msra.mxu0 0.0
    %864 = vmatprep.subr.mxu0 0.0
    %865 = vmatpush2.msra.mxu0 0.0
    %866 = vmatprep.subr.mxu0 0.0
    %867 = vmatpush2.msra.mxu0 0.0
    %868 = vmatprep.subr.mxu0 0.0
    %869 = vmatpush2.msra.mxu0 0.0
    %870 = vmatprep.subr.mxu0 0.0
    %871 = vmatpush2.msra.mxu0 0.0
    %872 = vmatprep.mubr.f32.mxu0 0.0
    %873 = vmatmul.mubr.f32.gmra.mxu0 %v723
    %v874 = vpop.f32.mrf.mxu0
    %v875 = vadd.f32 0.0, %v874
    %v876 = vpop.f32.mrf.mxu0
    %v877 = vadd.f32 0.0, %v876
    %878 = vdwg.mxu0
    %v879 = vadd.f32 %v597, %v804
    %v880 = vadd.f32 %v599, %v806
    %v881 = vadd.f32 %v668, %v875
    %v882 = vadd.f32 %v670, %v877
    %s883 = scalar_lea.vmem %s2, 12
    %v884 = vld [vmem:[%s883] sm:$0xf]
    %vm885 = vcmp.ge.s32.totalorder %v41, 0
    %vm886 = vcmp.lt.s32.totalorder %v41, 16
    %vm887 = vmand %vm885, %vm886
    %vm888 = vmand %vm887, %vm258
    %vm889 = vmand %vm888, %vm260
    %890 = vrot.lane.b32.xlu0 %v251, 1
    %v891 = vpop.permute.xlu0 %890
    %893 = vrot.lane.b32.xlu0 %v248, 1
    %v894 = vpop.permute.xlu0 %893
    %895 = vrot.lane.b32.xlu0 %v249, 1
    %v896 = vpop.permute.xlu0 %895
    %897 = vrot.lane.b32.xlu0 %v250, 1
    %v898 = vpop.permute.xlu0 %897
    %vm899 = vcmask 7168
    %v900 = vsel %vm899, %v894, %v896
    %v901 = vsel %vm899, %v896, %v898
    %v902 = vsel %vm899, %v898, %v891
    %v907 = vsel %vm899, %v891, %v894
    %v908 = vsel %vm889, 1, 0
    %v909 = vlaneseq
    %v910 = vshrl.u32 %v909, 7
    %v911 = vsub.s32 0, %v910
    %v912 = vrot.slane %v908, %v911
    %v913 = vlaneseq
    %v914 = vshrl.u32 %v913, 7
    %v915 = vsub.s32 1, %v914
    %v916 = vrot.slane %v908, %v915
    %v917 = vlaneseq
    %v918 = vshrl.u32 %v917, 7
    %v919 = vsub.s32 2, %v918
    %v920 = vrot.slane %v908, %v919
    %v921 = vlaneseq
    %v922 = vshrl.u32 %v921, 7
    %v923 = vsub.s32 3, %v922
    %v924 = vrot.slane %v908, %v923
    %vm925 = vcmp.eq.s32.totalorder %v912, 1
    %vm926 = vcmp.eq.s32.totalorder %v916, 1
    %vm927 = vcmp.eq.s32.totalorder %v920, 1
    %vm928 = vcmp.eq.s32.totalorder %v924, 1
    %v929 = vsel %vm925, %v907, 0.0
    %v930 = vsel %vm926, %v900, 0.0
    %v931 = vsel %vm927, %v901, 0.0
    %v932 = vsel %vm928, %v902, 0.0
    %v934 = vsel %vm357, %v884, 0
    %v937 = vsel %vm191, %v929, 0
    %v940 = vsel %vm191, %v930, 0
    %v943 = vsel %vm191, %v931, 0
    %v946 = vsel %vm191, %v932, 0
    %948 = vmatprep.subr.mxu0 0.0
    %949 = vmatpush1.msra.mxu0 0.0
    %950 = vmatprep.subr.mxu0 0.0
    %951 = vmatpush1.msra.mxu0 0.0
    %952 = vmatprep.subr.mxu0 0.0
    %953 = vmatpush1.msra.mxu0 0.0
    %954 = vmatprep.subr.mxu0 0.0
    %955 = vmatpush1.msra.mxu0 0.0
    %956 = vmatprep.subr.mxu0 0.0
    %957 = vmatpush1.msra.mxu0 0.0
    %958 = vmatprep.subr.mxu0 0.0
    %959 = vmatpush1.msra.mxu0 0.0
    %960 = vmatprep.subr.mxu0 0.0
    %961 = vmatpush1.msra.mxu0 0.0
    %962 = vmatprep.subr.mxu0 0.0
    %963 = vmatpush1.msra.mxu0 0.0
    %964 = vmatprep.subr.mxu0 0.0
    %965 = vmatpush1.msra.mxu0 0.0
    %966 = vmatprep.subr.mxu0 0.0
    %967 = vmatpush1.msra.mxu0 0.0
    %968 = vmatprep.subr.mxu0 0.0
    %969 = vmatpush1.msra.mxu0 0.0
    %970 = vmatprep.subr.mxu0 0.0
    %971 = vmatpush1.msra.mxu0 0.0
    %972 = vmatprep.subr.mxu0 0.0
    %973 = vmatpush1.msra.mxu0 0.0
    %974 = vmatprep.subr.mxu0 0.0
    %975 = vmatpush1.msra.mxu0 0.0
    %976 = vmatprep.subr.mxu0 0.0
    %977 = vmatpush1.msra.mxu0 0.0
    %978 = vmatprep.subr.mxu0 %v940
    %979 = vmatpush1.msra.mxu0 %v937
    %980 = vmatprep.subr.mxu0 0.0
    %981 = vmatpush2.msra.mxu0 0.0
    %982 = vmatprep.subr.mxu0 0.0
    %983 = vmatpush2.msra.mxu0 0.0
    %984 = vmatprep.subr.mxu0 0.0
    %985 = vmatpush2.msra.mxu0 0.0
    %986 = vmatprep.subr.mxu0 0.0
    %987 = vmatpush2.msra.mxu0 0.0
    %988 = vmatprep.subr.mxu0 0.0
    %989 = vmatpush2.msra.mxu0 0.0
    %990 = vmatprep.subr.mxu0 0.0
    %991 = vmatpush2.msra.mxu0 0.0
    %992 = vmatprep.subr.mxu0 0.0
    %993 = vmatpush2.msra.mxu0 0.0
    %994 = vmatprep.subr.mxu0 0.0
    %995 = vmatpush2.msra.mxu0 0.0
    %996 = vmatprep.subr.mxu0 0.0
    %997 = vmatpush2.msra.mxu0 0.0
    %998 = vmatprep.subr.mxu0 0.0
    %999 = vmatpush2.msra.mxu0 0.0
    %1000 = vmatprep.subr.mxu0 0.0
    %1001 = vmatpush2.msra.mxu0 0.0
    %1002 = vmatprep.subr.mxu0 0.0
    %1003 = vmatpush2.msra.mxu0 0.0
    %1004 = vmatprep.subr.mxu0 0.0
    %1005 = vmatpush2.msra.mxu0 0.0
    %1006 = vmatprep.subr.mxu0 0.0
    %1007 = vmatpush2.msra.mxu0 0.0
    %1008 = vmatprep.subr.mxu0 0.0
    %1009 = vmatpush2.msra.mxu0 0.0
    %1010 = vmatprep.subr.mxu0 0.0
    %1011 = vmatpush2.msra.mxu0 0.0
    %1012 = vmatprep.mubr.f32.mxu0 0.0
    %1013 = vmatmul.mubr.f32.gmra.mxu0 %v934
    %v1014 = vpop.f32.mrf.mxu0
    %v1015 = vadd.f32 0.0, %v1014
    %v1016 = vpop.f32.mrf.mxu0
    %v1017 = vadd.f32 0.0, %v1016
    %1018 = vdwg.mxu0
    %1019 = vmatprep.subr.mxu0 0.0
    %1020 = vmatpush1.msra.mxu0 0.0
    %1021 = vmatprep.subr.mxu0 0.0
    %1022 = vmatpush1.msra.mxu0 0.0
    %1023 = vmatprep.subr.mxu0 0.0
    %1024 = vmatpush1.msra.mxu0 0.0
    %1025 = vmatprep.subr.mxu0 0.0
    %1026 = vmatpush1.msra.mxu0 0.0
    %1027 = vmatprep.subr.mxu0 0.0
    %1028 = vmatpush1.msra.mxu0 0.0
    %1029 = vmatprep.subr.mxu0 0.0
    %1030 = vmatpush1.msra.mxu0 0.0
    %1031 = vmatprep.subr.mxu0 0.0
    %1032 = vmatpush1.msra.mxu0 0.0
    %1033 = vmatprep.subr.mxu0 0.0
    %1034 = vmatpush1.msra.mxu0 0.0
    %1035 = vmatprep.subr.mxu0 0.0
    %1036 = vmatpush1.msra.mxu0 0.0
    %1037 = vmatprep.subr.mxu0 0.0
    %1038 = vmatpush1.msra.mxu0 0.0
    %1039 = vmatprep.subr.mxu0 0.0
    %1040 = vmatpush1.msra.mxu0 0.0
    %1041 = vmatprep.subr.mxu0 0.0
    %1042 = vmatpush1.msra.mxu0 0.0
    %1043 = vmatprep.subr.mxu0 0.0
    %1044 = vmatpush1.msra.mxu0 0.0
    %1045 = vmatprep.subr.mxu0 0.0
    %1046 = vmatpush1.msra.mxu0 0.0
    %1047 = vmatprep.subr.mxu0 0.0
    %1048 = vmatpush1.msra.mxu0 0.0
    %1049 = vmatprep.subr.mxu0 %v946
    %1050 = vmatpush1.msra.mxu0 %v943
    %1051 = vmatprep.subr.mxu0 0.0
    %1052 = vmatpush2.msra.mxu0 0.0
    %1053 = vmatprep.subr.mxu0 0.0
    %1054 = vmatpush2.msra.mxu0 0.0
    %1055 = vmatprep.subr.mxu0 0.0
    %1056 = vmatpush2.msra.mxu0 0.0
    %1057 = vmatprep.subr.mxu0 0.0
    %1058 = vmatpush2.msra.mxu0 0.0
    %1059 = vmatprep.subr.mxu0 0.0
    %1060 = vmatpush2.msra.mxu0 0.0
    %1061 = vmatprep.subr.mxu0 0.0
    %1062 = vmatpush2.msra.mxu0 0.0
    %1063 = vmatprep.subr.mxu0 0.0
    %1064 = vmatpush2.msra.mxu0 0.0
    %1065 = vmatprep.subr.mxu0 0.0
    %1066 = vmatpush2.msra.mxu0 0.0
    %1067 = vmatprep.subr.mxu0 0.0
    %1068 = vmatpush2.msra.mxu0 0.0
    %1069 = vmatprep.subr.mxu0 0.0
    %1070 = vmatpush2.msra.mxu0 0.0
    %1071 = vmatprep.subr.mxu0 0.0
    %1072 = vmatpush2.msra.mxu0 0.0
    %1073 = vmatprep.subr.mxu0 0.0
    %1074 = vmatpush2.msra.mxu0 0.0
    %1075 = vmatprep.subr.mxu0 0.0
    %1076 = vmatpush2.msra.mxu0 0.0
    %1077 = vmatprep.subr.mxu0 0.0
    %1078 = vmatpush2.msra.mxu0 0.0
    %1079 = vmatprep.subr.mxu0 0.0
    %1080 = vmatpush2.msra.mxu0 0.0
    %1081 = vmatprep.subr.mxu0 0.0
    %1082 = vmatpush2.msra.mxu0 0.0
    %1083 = vmatprep.mubr.f32.mxu0 0.0
    %1084 = vmatmul.mubr.f32.gmra.mxu0 %v934
    %v1085 = vpop.f32.mrf.mxu0
    %v1086 = vadd.f32 0.0, %v1085
    %v1087 = vpop.f32.mrf.mxu0
    %v1088 = vadd.f32 0.0, %v1087
    %1089 = vdwg.mxu0
    %v1090 = vadd.f32 %v879, %v1015
    %v1091 = vadd.f32 %v880, %v1017
    %v1092 = vadd.f32 %v881, %v1086
    %v1093 = vadd.f32 %v882, %v1088
    %s1094 = scalar_lea.vmem %s2, 16
    %v1095 = vld [vmem:[%s1094] sm:$0xf]
    %v1097 = vsel %vm357, %v1095, 0
    %v1099 = vsel %vm191, %v248, 0
    %v1101 = vsel %vm191, %v249, 0
    %v1103 = vsel %vm191, %v250, 0
    %v1105 = vsel %vm191, %v251, 0
    %1107 = vmatprep.subr.mxu0 0.0
    %1108 = vmatpush1.msra.mxu0 0.0
    %1109 = vmatprep.subr.mxu0 0.0
    %1110 = vmatpush1.msra.mxu0 0.0
    %1111 = vmatprep.subr.mxu0 0.0
    %1112 = vmatpush1.msra.mxu0 0.0
    %1113 = vmatprep.subr.mxu0 0.0
    %1114 = vmatpush1.msra.mxu0 0.0
    %1115 = vmatprep.subr.mxu0 0.0
    %1116 = vmatpush1.msra.mxu0 0.0
    %1117 = vmatprep.subr.mxu0 0.0
    %1118 = vmatpush1.msra.mxu0 0.0
    %1119 = vmatprep.subr.mxu0 0.0
    %1120 = vmatpush1.msra.mxu0 0.0
    %1121 = vmatprep.subr.mxu0 0.0
    %1122 = vmatpush1.msra.mxu0 0.0
    %1123 = vmatprep.subr.mxu0 0.0
    %1124 = vmatpush1.msra.mxu0 0.0
    %1125 = vmatprep.subr.mxu0 0.0
    %1126 = vmatpush1.msra.mxu0 0.0
    %1127 = vmatprep.subr.mxu0 0.0
    %1128 = vmatpush1.msra.mxu0 0.0
    %1129 = vmatprep.subr.mxu0 0.0
    %1130 = vmatpush1.msra.mxu0 0.0
    %1131 = vmatprep.subr.mxu0 0.0
    %1132 = vmatpush1.msra.mxu0 0.0
    %1133 = vmatprep.subr.mxu0 0.0
    %1134 = vmatpush1.msra.mxu0 0.0
    %1135 = vmatprep.subr.mxu0 0.0
    %1136 = vmatpush1.msra.mxu0 0.0
    %1137 = vmatprep.subr.mxu0 %v1101
    %1138 = vmatpush1.msra.mxu0 %v1099
    %1139 = vmatprep.subr.mxu0 0.0
    %1140 = vmatpush2.msra.mxu0 0.0
    %1141 = vmatprep.subr.mxu0 0.0
    %1142 = vmatpush2.msra.mxu0 0.0
    %1143 = vmatprep.subr.mxu0 0.0
    %1144 = vmatpush2.msra.mxu0 0.0
    %1145 = vmatprep.subr.mxu0 0.0
    %1146 = vmatpush2.msra.mxu0 0.0
    %1147 = vmatprep.subr.mxu0 0.0
    %1148 = vmatpush2.msra.mxu0 0.0
    %1149 = vmatprep.subr.mxu0 0.0
    %1150 = vmatpush2.msra.mxu0 0.0
    %1151 = vmatprep.subr.mxu0 0.0
    %1152 = vmatpush2.msra.mxu0 0.0
    %1153 = vmatprep.subr.mxu0 0.0
    %1154 = vmatpush2.msra.mxu0 0.0
    %1155 = vmatprep.subr.mxu0 0.0
    %1156 = vmatpush2.msra.mxu0 0.0
    %1157 = vmatprep.subr.mxu0 0.0
    %1158 = vmatpush2.msra.mxu0 0.0
    %1159 = vmatprep.subr.mxu0 0.0
    %1160 = vmatpush2.msra.mxu0 0.0
    %1161 = vmatprep.subr.mxu0 0.0
    %1162 = vmatpush2.msra.mxu0 0.0
    %1163 = vmatprep.subr.mxu0 0.0
    %1164 = vmatpush2.msra.mxu0 0.0
    %1165 = vmatprep.subr.mxu0 0.0
    %1166 = vmatpush2.msra.mxu0 0.0
    %1167 = vmatprep.subr.mxu0 0.0
    %1168 = vmatpush2.msra.mxu0 0.0
    %1169 = vmatprep.subr.mxu0 0.0
    %1170 = vmatpush2.msra.mxu0 0.0
    %1171 = vmatprep.mubr.f32.mxu0 0.0
    %1172 = vmatmul.mubr.f32.gmra.mxu0 %v1097
    %v1173 = vpop.f32.mrf.mxu0
    %v1174 = vadd.f32 0.0, %v1173
    %v1175 = vpop.f32.mrf.mxu0
    %v1176 = vadd.f32 0.0, %v1175
    %1177 = vdwg.mxu0
    %1178 = vmatprep.subr.mxu0 0.0
    %1179 = vmatpush1.msra.mxu0 0.0
    %1180 = vmatprep.subr.mxu0 0.0
    %1181 = vmatpush1.msra.mxu0 0.0
    %1182 = vmatprep.subr.mxu0 0.0
    %1183 = vmatpush1.msra.mxu0 0.0
    %1184 = vmatprep.subr.mxu0 0.0
    %1185 = vmatpush1.msra.mxu0 0.0
    %1186 = vmatprep.subr.mxu0 0.0
    %1187 = vmatpush1.msra.mxu0 0.0
    %1188 = vmatprep.subr.mxu0 0.0
    %1189 = vmatpush1.msra.mxu0 0.0
    %1190 = vmatprep.subr.mxu0 0.0
    %1191 = vmatpush1.msra.mxu0 0.0
    %1192 = vmatprep.subr.mxu0 0.0
    %1193 = vmatpush1.msra.mxu0 0.0
    %1194 = vmatprep.subr.mxu0 0.0
    %1195 = vmatpush1.msra.mxu0 0.0
    %1196 = vmatprep.subr.mxu0 0.0
    %1197 = vmatpush1.msra.mxu0 0.0
    %1198 = vmatprep.subr.mxu0 0.0
    %1199 = vmatpush1.msra.mxu0 0.0
    %1200 = vmatprep.subr.mxu0 0.0
    %1201 = vmatpush1.msra.mxu0 0.0
    %1202 = vmatprep.subr.mxu0 0.0
    %1203 = vmatpush1.msra.mxu0 0.0
    %1204 = vmatprep.subr.mxu0 0.0
    %1205 = vmatpush1.msra.mxu0 0.0
    %1206 = vmatprep.subr.mxu0 0.0
    %1207 = vmatpush1.msra.mxu0 0.0
    %1208 = vmatprep.subr.mxu0 %v1105
    %1209 = vmatpush1.msra.mxu0 %v1103
    %1210 = vmatprep.subr.mxu0 0.0
    %1211 = vmatpush2.msra.mxu0 0.0
    %1212 = vmatprep.subr.mxu0 0.0
    %1213 = vmatpush2.msra.mxu0 0.0
    %1214 = vmatprep.subr.mxu0 0.0
    %1215 = vmatpush2.msra.mxu0 0.0
    %1216 = vmatprep.subr.mxu0 0.0
    %1217 = vmatpush2.msra.mxu0 0.0
    %1218 = vmatprep.subr.mxu0 0.0
    %1219 = vmatpush2.msra.mxu0 0.0
    %1220 = vmatprep.subr.mxu0 0.0
    %1221 = vmatpush2.msra.mxu0 0.0
    %1222 = vmatprep.subr.mxu0 0.0
    %1223 = vmatpush2.msra.mxu0 0.0
    %1224 = vmatprep.subr.mxu0 0.0
    %1225 = vmatpush2.msra.mxu0 0.0
    %1226 = vmatprep.subr.mxu0 0.0
    %1227 = vmatpush2.msra.mxu0 0.0
    %1228 = vmatprep.subr.mxu0 0.0
    %1229 = vmatpush2.msra.mxu0 0.0
    %1230 = vmatprep.subr.mxu0 0.0
    %1231 = vmatpush2.msra.mxu0 0.0
    %1232 = vmatprep.subr.mxu0 0.0
    %1233 = vmatpush2.msra.mxu0 0.0
    %1234 = vmatprep.subr.mxu0 0.0
    %1235 = vmatpush2.msra.mxu0 0.0
    %1236 = vmatprep.subr.mxu0 0.0
    %1237 = vmatpush2.msra.mxu0 0.0
    %1238 = vmatprep.subr.mxu0 0.0
    %1239 = vmatpush2.msra.mxu0 0.0
    %1240 = vmatprep.subr.mxu0 0.0
    %1241 = vmatpush2.msra.mxu0 0.0
    %1242 = vmatprep.mubr.f32.mxu0 0.0
    %1243 = vmatmul.mubr.f32.gmra.mxu0 %v1097
    %v1244 = vpop.f32.mrf.mxu0
    %v1245 = vadd.f32 0.0, %v1244
    %v1246 = vpop.f32.mrf.mxu0
    %v1247 = vadd.f32 0.0, %v1246
    %1248 = vdwg.mxu0
    %v1249 = vadd.f32 %v1090, %v1174
    %v1250 = vadd.f32 %v1091, %v1176
    %v1251 = vadd.f32 %v1092, %v1245
    %v1252 = vadd.f32 %v1093, %v1247
    %s1253 = scalar_lea.vmem %s2, 20
    %v1254 = vld [vmem:[%s1253] sm:$0xf]
    %vm1255 = vmand %vm887, %vm675
    %vm1256 = vmand %vm1255, %vm677
    %1257 = vrot.lane.b32.xlu0 %v248, 127
    %v1258 = vpop.permute.xlu0 %1257
    %1259 = vrot.lane.b32.xlu0 %v249, 127
    %v1260 = vpop.permute.xlu0 %1259
    %1261 = vrot.lane.b32.xlu0 %v250, 127
    %v1262 = vpop.permute.xlu0 %1261
    %1263 = vrot.lane.b32.xlu0 %v251, 127
    %v1264 = vpop.permute.xlu0 %1263
    %vm1265 = vcmask 1039360
    %v1266 = vsel %vm1265, %v1258, %v1260
    %v1267 = vsel %vm1265, %v1260, %v1262
    %v1268 = vsel %vm1265, %v1262, %v1264
    %v1274 = vsel %vm1265, %v1264, %v1258
    %v1275 = vsel %vm1256, 1, 0
    %v1276 = vlaneseq
    %v1277 = vshrl.u32 %v1276, 7
    %v1278 = vsub.s32 0, %v1277
    %v1279 = vrot.slane %v1275, %v1278
    %v1280 = vlaneseq
    %v1281 = vshrl.u32 %v1280, 7
    %v1282 = vsub.s32 1, %v1281
    %v1283 = vrot.slane %v1275, %v1282
    %v1284 = vlaneseq
    %v1285 = vshrl.u32 %v1284, 7
    %v1286 = vsub.s32 2, %v1285
    %v1287 = vrot.slane %v1275, %v1286
    %v1288 = vlaneseq
    %v1289 = vshrl.u32 %v1288, 7
    %v1290 = vsub.s32 3, %v1289
    %v1291 = vrot.slane %v1275, %v1290
    %vm1292 = vcmp.eq.s32.totalorder %v1279, 1
    %vm1293 = vcmp.eq.s32.totalorder %v1283, 1
    %vm1294 = vcmp.eq.s32.totalorder %v1287, 1
    %vm1295 = vcmp.eq.s32.totalorder %v1291, 1
    %v1296 = vsel %vm1292, %v1266, 0.0
    %v1297 = vsel %vm1293, %v1267, 0.0
    %v1298 = vsel %vm1294, %v1268, 0.0
    %v1299 = vsel %vm1295, %v1274, 0.0
    %v1301 = vsel %vm357, %v1254, 0
    %v1304 = vsel %vm191, %v1296, 0
    %v1307 = vsel %vm191, %v1297, 0
    %v1310 = vsel %vm191, %v1298, 0
    %v1313 = vsel %vm191, %v1299, 0
    %1315 = vmatprep.subr.mxu0 0.0
    %1316 = vmatpush1.msra.mxu0 0.0
    %1317 = vmatprep.subr.mxu0 0.0
    %1318 = vmatpush1.msra.mxu0 0.0
    %1319 = vmatprep.subr.mxu0 0.0
    %1320 = vmatpush1.msra.mxu0 0.0
    %1321 = vmatprep.subr.mxu0 0.0
    %1322 = vmatpush1.msra.mxu0 0.0
    %1323 = vmatprep.subr.mxu0 0.0
    %1324 = vmatpush1.msra.mxu0 0.0
    %1325 = vmatprep.subr.mxu0 0.0
    %1326 = vmatpush1.msra.mxu0 0.0
    %1327 = vmatprep.subr.mxu0 0.0
    %1328 = vmatpush1.msra.mxu0 0.0
    %1329 = vmatprep.subr.mxu0 0.0
    %1330 = vmatpush1.msra.mxu0 0.0
    %1331 = vmatprep.subr.mxu0 0.0
    %1332 = vmatpush1.msra.mxu0 0.0
    %1333 = vmatprep.subr.mxu0 0.0
    %1334 = vmatpush1.msra.mxu0 0.0
    %1335 = vmatprep.subr.mxu0 0.0
    %1336 = vmatpush1.msra.mxu0 0.0
    %1337 = vmatprep.subr.mxu0 0.0
    %1338 = vmatpush1.msra.mxu0 0.0
    %1339 = vmatprep.subr.mxu0 0.0
    %1340 = vmatpush1.msra.mxu0 0.0
    %1341 = vmatprep.subr.mxu0 0.0
    %1342 = vmatpush1.msra.mxu0 0.0
    %1343 = vmatprep.subr.mxu0 0.0
    %1344 = vmatpush1.msra.mxu0 0.0
    %1345 = vmatprep.subr.mxu0 %v1307
    %1346 = vmatpush1.msra.mxu0 %v1304
    %1347 = vmatprep.subr.mxu0 0.0
    %1348 = vmatpush2.msra.mxu0 0.0
    %1349 = vmatprep.subr.mxu0 0.0
    %1350 = vmatpush2.msra.mxu0 0.0
    %1351 = vmatprep.subr.mxu0 0.0
    %1352 = vmatpush2.msra.mxu0 0.0
    %1353 = vmatprep.subr.mxu0 0.0
    %1354 = vmatpush2.msra.mxu0 0.0
    %1355 = vmatprep.subr.mxu0 0.0
    %1356 = vmatpush2.msra.mxu0 0.0
    %1357 = vmatprep.subr.mxu0 0.0
    %1358 = vmatpush2.msra.mxu0 0.0
    %1359 = vmatprep.subr.mxu0 0.0
    %1360 = vmatpush2.msra.mxu0 0.0
    %1361 = vmatprep.subr.mxu0 0.0
    %1362 = vmatpush2.msra.mxu0 0.0
    %1363 = vmatprep.subr.mxu0 0.0
    %1364 = vmatpush2.msra.mxu0 0.0
    %1365 = vmatprep.subr.mxu0 0.0
    %1366 = vmatpush2.msra.mxu0 0.0
    %1367 = vmatprep.subr.mxu0 0.0
    %1368 = vmatpush2.msra.mxu0 0.0
    %1369 = vmatprep.subr.mxu0 0.0
    %1370 = vmatpush2.msra.mxu0 0.0
    %1371 = vmatprep.subr.mxu0 0.0
    %1372 = vmatpush2.msra.mxu0 0.0
    %1373 = vmatprep.subr.mxu0 0.0
    %1374 = vmatpush2.msra.mxu0 0.0
    %1375 = vmatprep.subr.mxu0 0.0
    %1376 = vmatpush2.msra.mxu0 0.0
    %1377 = vmatprep.subr.mxu0 0.0
    %1378 = vmatpush2.msra.mxu0 0.0
    %1379 = vmatprep.mubr.f32.mxu0 0.0
    %1380 = vmatmul.mubr.f32.gmra.mxu0 %v1301
    %v1381 = vpop.f32.mrf.mxu0
    %v1382 = vadd.f32 0.0, %v1381
    %v1383 = vpop.f32.mrf.mxu0
    %v1384 = vadd.f32 0.0, %v1383
    %1385 = vdwg.mxu0
    %1386 = vmatprep.subr.mxu0 0.0
    %1387 = vmatpush1.msra.mxu0 0.0
    %1388 = vmatprep.subr.mxu0 0.0
    %1389 = vmatpush1.msra.mxu0 0.0
    %1390 = vmatprep.subr.mxu0 0.0
    %1391 = vmatpush1.msra.mxu0 0.0
    %1392 = vmatprep.subr.mxu0 0.0
    %1393 = vmatpush1.msra.mxu0 0.0
    %1394 = vmatprep.subr.mxu0 0.0
    %1395 = vmatpush1.msra.mxu0 0.0
    %1396 = vmatprep.subr.mxu0 0.0
    %1397 = vmatpush1.msra.mxu0 0.0
    %1398 = vmatprep.subr.mxu0 0.0
    %1399 = vmatpush1.msra.mxu0 0.0
    %1400 = vmatprep.subr.mxu0 0.0
    %1401 = vmatpush1.msra.mxu0 0.0
    %1402 = vmatprep.subr.mxu0 0.0
    %1403 = vmatpush1.msra.mxu0 0.0
    %1404 = vmatprep.subr.mxu0 0.0
    %1405 = vmatpush1.msra.mxu0 0.0
    %1406 = vmatprep.subr.mxu0 0.0
    %1407 = vmatpush1.msra.mxu0 0.0
    %1408 = vmatprep.subr.mxu0 0.0
    %1409 = vmatpush1.msra.mxu0 0.0
    %1410 = vmatprep.subr.mxu0 0.0
    %1411 = vmatpush1.msra.mxu0 0.0
    %1412 = vmatprep.subr.mxu0 0.0
    %1413 = vmatpush1.msra.mxu0 0.0
    %1414 = vmatprep.subr.mxu0 0.0
    %1415 = vmatpush1.msra.mxu0 0.0
    %1416 = vmatprep.subr.mxu0 %v1313
    %1417 = vmatpush1.msra.mxu0 %v1310
    %1418 = vmatprep.subr.mxu0 0.0
    %1419 = vmatpush2.msra.mxu0 0.0
    %1420 = vmatprep.subr.mxu0 0.0
    %1421 = vmatpush2.msra.mxu0 0.0
    %1422 = vmatprep.subr.mxu0 0.0
    %1423 = vmatpush2.msra.mxu0 0.0
    %1424 = vmatprep.subr.mxu0 0.0
    %1425 = vmatpush2.msra.mxu0 0.0
    %1426 = vmatprep.subr.mxu0 0.0
    %1427 = vmatpush2.msra.mxu0 0.0
    %1428 = vmatprep.subr.mxu0 0.0
    %1429 = vmatpush2.msra.mxu0 0.0
    %1430 = vmatprep.subr.mxu0 0.0
    %1431 = vmatpush2.msra.mxu0 0.0
    %1432 = vmatprep.subr.mxu0 0.0
    %1433 = vmatpush2.msra.mxu0 0.0
    %1434 = vmatprep.subr.mxu0 0.0
    %1435 = vmatpush2.msra.mxu0 0.0
    %1436 = vmatprep.subr.mxu0 0.0
    %1437 = vmatpush2.msra.mxu0 0.0
    %1438 = vmatprep.subr.mxu0 0.0
    %1439 = vmatpush2.msra.mxu0 0.0
    %1440 = vmatprep.subr.mxu0 0.0
    %1441 = vmatpush2.msra.mxu0 0.0
    %1442 = vmatprep.subr.mxu0 0.0
    %1443 = vmatpush2.msra.mxu0 0.0
    %1444 = vmatprep.subr.mxu0 0.0
    %1445 = vmatpush2.msra.mxu0 0.0
    %1446 = vmatprep.subr.mxu0 0.0
    %1447 = vmatpush2.msra.mxu0 0.0
    %1448 = vmatprep.subr.mxu0 0.0
    %1449 = vmatpush2.msra.mxu0 0.0
    %1450 = vmatprep.mubr.f32.mxu0 0.0
    %1451 = vmatmul.mubr.f32.gmra.mxu0 %v1301
    %v1452 = vpop.f32.mrf.mxu0
    %v1453 = vadd.f32 0.0, %v1452
    %v1454 = vpop.f32.mrf.mxu0
    %v1455 = vadd.f32 0.0, %v1454
    %1456 = vdwg.mxu0
    %v1457 = vadd.f32 %v1249, %v1382
    %v1458 = vadd.f32 %v1250, %v1384
    %v1459 = vadd.f32 %v1251, %v1453
    %v1460 = vadd.f32 %v1252, %v1455
    %s1461 = scalar_lea.vmem %s2, 24
    %v1462 = vld [vmem:[%s1461] sm:$0xf]
    %v1463 = vadd.s32 %v41, 1
    %vm1464 = vcmp.ge.s32.totalorder %v1463, 0
    %vm1465 = vcmp.lt.s32.totalorder %v1463, 16
    %vm1466 = vmand %vm1464, %vm1465
    %vm1467 = vmand %vm1466, %vm258
    %vm1468 = vmand %vm1467, %vm260
    %1469 = vrot.lane.b32.xlu0 %v248, 113
    %v1470 = vpop.permute.xlu0 %1469
    %1471 = vrot.lane.b32.xlu0 %v249, 113
    %v1472 = vpop.permute.xlu0 %1471
    %1473 = vrot.lane.b32.xlu0 %v250, 113
    %v1474 = vpop.permute.xlu0 %1473
    %1475 = vrot.lane.b32.xlu0 %v251, 113
    %v1476 = vpop.permute.xlu0 %1475
    %vm1477 = vcmask 924672
    %v1478 = vsel %vm1477, %v1470, %v1472
    %v1479 = vsel %vm1477, %v1472, %v1474
    %v1480 = vsel %vm1477, %v1474, %v1476
    %v1486 = vsel %vm1477, %v1476, %v1470
    %v1487 = vsel %vm1468, 1, 0
    %v1488 = vlaneseq
    %v1489 = vshrl.u32 %v1488, 7
    %v1490 = vsub.s32 0, %v1489
    %v1491 = vrot.slane %v1487, %v1490
    %v1492 = vlaneseq
    %v1493 = vshrl.u32 %v1492, 7
    %v1494 = vsub.s32 1, %v1493
    %v1495 = vrot.slane %v1487, %v1494
    %v1496 = vlaneseq
    %v1497 = vshrl.u32 %v1496, 7
    %v1498 = vsub.s32 2, %v1497
    %v1499 = vrot.slane %v1487, %v1498
    %v1500 = vlaneseq
    %v1501 = vshrl.u32 %v1500, 7
    %v1502 = vsub.s32 3, %v1501
    %v1503 = vrot.slane %v1487, %v1502
    %vm1504 = vcmp.eq.s32.totalorder %v1491, 1
    %vm1505 = vcmp.eq.s32.totalorder %v1495, 1
    %vm1506 = vcmp.eq.s32.totalorder %v1499, 1
    %vm1507 = vcmp.eq.s32.totalorder %v1503, 1
    %v1508 = vsel %vm1504, %v1478, 0.0
    %v1509 = vsel %vm1505, %v1479, 0.0
    %v1510 = vsel %vm1506, %v1480, 0.0
    %v1511 = vsel %vm1507, %v1486, 0.0
    %v1513 = vsel %vm357, %v1462, 0
    %v1516 = vsel %vm191, %v1508, 0
    %v1519 = vsel %vm191, %v1509, 0
    %v1522 = vsel %vm191, %v1510, 0
    %v1525 = vsel %vm191, %v1511, 0
    %1527 = vmatprep.subr.mxu0 0.0
    %1528 = vmatpush1.msra.mxu0 0.0
    %1529 = vmatprep.subr.mxu0 0.0
    %1530 = vmatpush1.msra.mxu0 0.0
    %1531 = vmatprep.subr.mxu0 0.0
    %1532 = vmatpush1.msra.mxu0 0.0
    %1533 = vmatprep.subr.mxu0 0.0
    %1534 = vmatpush1.msra.mxu0 0.0
    %1535 = vmatprep.subr.mxu0 0.0
    %1536 = vmatpush1.msra.mxu0 0.0
    %1537 = vmatprep.subr.mxu0 0.0
    %1538 = vmatpush1.msra.mxu0 0.0
    %1539 = vmatprep.subr.mxu0 0.0
    %1540 = vmatpush1.msra.mxu0 0.0
    %1541 = vmatprep.subr.mxu0 0.0
    %1542 = vmatpush1.msra.mxu0 0.0
    %1543 = vmatprep.subr.mxu0 0.0
    %1544 = vmatpush1.msra.mxu0 0.0
    %1545 = vmatprep.subr.mxu0 0.0
    %1546 = vmatpush1.msra.mxu0 0.0
    %1547 = vmatprep.subr.mxu0 0.0
    %1548 = vmatpush1.msra.mxu0 0.0
    %1549 = vmatprep.subr.mxu0 0.0
    %1550 = vmatpush1.msra.mxu0 0.0
    %1551 = vmatprep.subr.mxu0 0.0
    %1552 = vmatpush1.msra.mxu0 0.0
    %1553 = vmatprep.subr.mxu0 0.0
    %1554 = vmatpush1.msra.mxu0 0.0
    %1555 = vmatprep.subr.mxu0 0.0
    %1556 = vmatpush1.msra.mxu0 0.0
    %1557 = vmatprep.subr.mxu0 %v1519
    %1558 = vmatpush1.msra.mxu0 %v1516
    %1559 = vmatprep.subr.mxu0 0.0
    %1560 = vmatpush2.msra.mxu0 0.0
    %1561 = vmatprep.subr.mxu0 0.0
    %1562 = vmatpush2.msra.mxu0 0.0
    %1563 = vmatprep.subr.mxu0 0.0
    %1564 = vmatpush2.msra.mxu0 0.0
    %1565 = vmatprep.subr.mxu0 0.0
    %1566 = vmatpush2.msra.mxu0 0.0
    %1567 = vmatprep.subr.mxu0 0.0
    %1568 = vmatpush2.msra.mxu0 0.0
    %1569 = vmatprep.subr.mxu0 0.0
    %1570 = vmatpush2.msra.mxu0 0.0
    %1571 = vmatprep.subr.mxu0 0.0
    %1572 = vmatpush2.msra.mxu0 0.0
    %1573 = vmatprep.subr.mxu0 0.0
    %1574 = vmatpush2.msra.mxu0 0.0
    %1575 = vmatprep.subr.mxu0 0.0
    %1576 = vmatpush2.msra.mxu0 0.0
    %1577 = vmatprep.subr.mxu0 0.0
    %1578 = vmatpush2.msra.mxu0 0.0
    %1579 = vmatprep.subr.mxu0 0.0
    %1580 = vmatpush2.msra.mxu0 0.0
    %1581 = vmatprep.subr.mxu0 0.0
    %1582 = vmatpush2.msra.mxu0 0.0
    %1583 = vmatprep.subr.mxu0 0.0
    %1584 = vmatpush2.msra.mxu0 0.0
    %1585 = vmatprep.subr.mxu0 0.0
    %1586 = vmatpush2.msra.mxu0 0.0
    %1587 = vmatprep.subr.mxu0 0.0
    %1588 = vmatpush2.msra.mxu0 0.0
    %1589 = vmatprep.subr.mxu0 0.0
    %1590 = vmatpush2.msra.mxu0 0.0
    %1591 = vmatprep.mubr.f32.mxu0 0.0
    %1592 = vmatmul.mubr.f32.gmra.mxu0 %v1513
    %v1593 = vpop.f32.mrf.mxu0
    %v1594 = vadd.f32 0.0, %v1593
    %v1595 = vpop.f32.mrf.mxu0
    %v1596 = vadd.f32 0.0, %v1595
    %1597 = vdwg.mxu0
    %1598 = vmatprep.subr.mxu0 0.0
    %1599 = vmatpush1.msra.mxu0 0.0
    %1600 = vmatprep.subr.mxu0 0.0
    %1601 = vmatpush1.msra.mxu0 0.0
    %1602 = vmatprep.subr.mxu0 0.0
    %1603 = vmatpush1.msra.mxu0 0.0
    %1604 = vmatprep.subr.mxu0 0.0
    %1605 = vmatpush1.msra.mxu0 0.0
    %1606 = vmatprep.subr.mxu0 0.0
    %1607 = vmatpush1.msra.mxu0 0.0
    %1608 = vmatprep.subr.mxu0 0.0
    %1609 = vmatpush1.msra.mxu0 0.0
    %1610 = vmatprep.subr.mxu0 0.0
    %1611 = vmatpush1.msra.mxu0 0.0
    %1612 = vmatprep.subr.mxu0 0.0
    %1613 = vmatpush1.msra.mxu0 0.0
    %1614 = vmatprep.subr.mxu0 0.0
    %1615 = vmatpush1.msra.mxu0 0.0
    %1616 = vmatprep.subr.mxu0 0.0
    %1617 = vmatpush1.msra.mxu0 0.0
    %1618 = vmatprep.subr.mxu0 0.0
    %1619 = vmatpush1.msra.mxu0 0.0
    %1620 = vmatprep.subr.mxu0 0.0
    %1621 = vmatpush1.msra.mxu0 0.0
    %1622 = vmatprep.subr.mxu0 0.0
    %1623 = vmatpush1.msra.mxu0 0.0
    %1624 = vmatprep.subr.mxu0 0.0
    %1625 = vmatpush1.msra.mxu0 0.0
    %1626 = vmatprep.subr.mxu0 0.0
    %1627 = vmatpush1.msra.mxu0 0.0
    %1628 = vmatprep.subr.mxu0 %v1525
    %1629 = vmatpush1.msra.mxu0 %v1522
    %1630 = vmatprep.subr.mxu0 0.0
    %1631 = vmatpush2.msra.mxu0 0.0
    %1632 = vmatprep.subr.mxu0 0.0
    %1633 = vmatpush2.msra.mxu0 0.0
    %1634 = vmatprep.subr.mxu0 0.0
    %1635 = vmatpush2.msra.mxu0 0.0
    %1636 = vmatprep.subr.mxu0 0.0
    %1637 = vmatpush2.msra.mxu0 0.0
    %1638 = vmatprep.subr.mxu0 0.0
    %1639 = vmatpush2.msra.mxu0 0.0
    %1640 = vmatprep.subr.mxu0 0.0
    %1641 = vmatpush2.msra.mxu0 0.0
    %1642 = vmatprep.subr.mxu0 0.0
    %1643 = vmatpush2.msra.mxu0 0.0
    %1644 = vmatprep.subr.mxu0 0.0
    %1645 = vmatpush2.msra.mxu0 0.0
    %1646 = vmatprep.subr.mxu0 0.0
    %1647 = vmatpush2.msra.mxu0 0.0
    %1648 = vmatprep.subr.mxu0 0.0
    %1649 = vmatpush2.msra.mxu0 0.0
    %1650 = vmatprep.subr.mxu0 0.0
    %1651 = vmatpush2.msra.mxu0 0.0
    %1652 = vmatprep.subr.mxu0 0.0
    %1653 = vmatpush2.msra.mxu0 0.0
    %1654 = vmatprep.subr.mxu0 0.0
    %1655 = vmatpush2.msra.mxu0 0.0
    %1656 = vmatprep.subr.mxu0 0.0
    %1657 = vmatpush2.msra.mxu0 0.0
    %1658 = vmatprep.subr.mxu0 0.0
    %1659 = vmatpush2.msra.mxu0 0.0
    %1660 = vmatprep.subr.mxu0 0.0
    %1661 = vmatpush2.msra.mxu0 0.0
    %1662 = vmatprep.mubr.f32.mxu0 0.0
    %1663 = vmatmul.mubr.f32.gmra.mxu0 %v1513
    %v1664 = vpop.f32.mrf.mxu0
    %v1665 = vadd.f32 0.0, %v1664
    %v1666 = vpop.f32.mrf.mxu0
    %v1667 = vadd.f32 0.0, %v1666
    %1668 = vdwg.mxu0
    %v1669 = vadd.f32 %v1457, %v1594
    %v1670 = vadd.f32 %v1458, %v1596
    %v1671 = vadd.f32 %v1459, %v1665
    %v1672 = vadd.f32 %v1460, %v1667
    %s1673 = scalar_lea.vmem %s2, 28
    %v1674 = vld [vmem:[%s1673] sm:$0xf]
    %vm1675 = vmand %vm1466, %vm311
    %vm1676 = vmand %vm1675, %vm313
    %1677 = vrot.lane.b32.xlu0 %v248, 112
    %v1678 = vpop.permute.xlu0 %1677
    %1679 = vrot.lane.b32.xlu0 %v249, 112
    %v1680 = vpop.permute.xlu0 %1679
    %1681 = vrot.lane.b32.xlu0 %v250, 112
    %v1682 = vpop.permute.xlu0 %1681
    %1683 = vrot.lane.b32.xlu0 %v251, 112
    %v1684 = vpop.permute.xlu0 %1683
    %vm1685 = vcmask 916480
    %v1686 = vsel %vm1685, %v1678, %v1680
    %v1687 = vsel %vm1685, %v1680, %v1682
    %v1688 = vsel %vm1685, %v1682, %v1684
    %v1694 = vsel %vm1685, %v1684, %v1678
    %v1695 = vsel %vm1676, 1, 0
    %v1696 = vlaneseq
    %v1697 = vshrl.u32 %v1696, 7
    %v1698 = vsub.s32 0, %v1697
    %v1699 = vrot.slane %v1695, %v1698
    %v1700 = vlaneseq
    %v1701 = vshrl.u32 %v1700, 7
    %v1702 = vsub.s32 1, %v1701
    %v1703 = vrot.slane %v1695, %v1702
    %v1704 = vlaneseq
    %v1705 = vshrl.u32 %v1704, 7
    %v1706 = vsub.s32 2, %v1705
    %v1707 = vrot.slane %v1695, %v1706
    %v1708 = vlaneseq
    %v1709 = vshrl.u32 %v1708, 7
    %v1710 = vsub.s32 3, %v1709
    %v1711 = vrot.slane %v1695, %v1710
    %vm1712 = vcmp.eq.s32.totalorder %v1699, 1
    %vm1713 = vcmp.eq.s32.totalorder %v1703, 1
    %vm1714 = vcmp.eq.s32.totalorder %v1707, 1
    %vm1715 = vcmp.eq.s32.totalorder %v1711, 1
    %v1716 = vsel %vm1712, %v1686, 0.0
    %v1717 = vsel %vm1713, %v1687, 0.0
    %v1718 = vsel %vm1714, %v1688, 0.0
    %v1719 = vsel %vm1715, %v1694, 0.0
    %v1721 = vsel %vm357, %v1674, 0
    %v1724 = vsel %vm191, %v1716, 0
    %v1727 = vsel %vm191, %v1717, 0
    %v1730 = vsel %vm191, %v1718, 0
    %v1733 = vsel %vm191, %v1719, 0
    %1735 = vmatprep.subr.mxu0 0.0
    %1736 = vmatpush1.msra.mxu0 0.0
    %1737 = vmatprep.subr.mxu0 0.0
    %1738 = vmatpush1.msra.mxu0 0.0
    %1739 = vmatprep.subr.mxu0 0.0
    %1740 = vmatpush1.msra.mxu0 0.0
    %1741 = vmatprep.subr.mxu0 0.0
    %1742 = vmatpush1.msra.mxu0 0.0
    %1743 = vmatprep.subr.mxu0 0.0
    %1744 = vmatpush1.msra.mxu0 0.0
    %1745 = vmatprep.subr.mxu0 0.0
    %1746 = vmatpush1.msra.mxu0 0.0
    %1747 = vmatprep.subr.mxu0 0.0
    %1748 = vmatpush1.msra.mxu0 0.0
    %1749 = vmatprep.subr.mxu0 0.0
    %1750 = vmatpush1.msra.mxu0 0.0
    %1751 = vmatprep.subr.mxu0 0.0
    %1752 = vmatpush1.msra.mxu0 0.0
    %1753 = vmatprep.subr.mxu0 0.0
    %1754 = vmatpush1.msra.mxu0 0.0
    %1755 = vmatprep.subr.mxu0 0.0
    %1756 = vmatpush1.msra.mxu0 0.0
    %1757 = vmatprep.subr.mxu0 0.0
    %1758 = vmatpush1.msra.mxu0 0.0
    %1759 = vmatprep.subr.mxu0 0.0
    %1760 = vmatpush1.msra.mxu0 0.0
    %1761 = vmatprep.subr.mxu0 0.0
    %1762 = vmatpush1.msra.mxu0 0.0
    %1763 = vmatprep.subr.mxu0 0.0
    %1764 = vmatpush1.msra.mxu0 0.0
    %1765 = vmatprep.subr.mxu0 %v1727
    %1766 = vmatpush1.msra.mxu0 %v1724
    %1767 = vmatprep.subr.mxu0 0.0
    %1768 = vmatpush2.msra.mxu0 0.0
    %1769 = vmatprep.subr.mxu0 0.0
    %1770 = vmatpush2.msra.mxu0 0.0
    %1771 = vmatprep.subr.mxu0 0.0
    %1772 = vmatpush2.msra.mxu0 0.0
    %1773 = vmatprep.subr.mxu0 0.0
    %1774 = vmatpush2.msra.mxu0 0.0
    %1775 = vmatprep.subr.mxu0 0.0
    %1776 = vmatpush2.msra.mxu0 0.0
    %1777 = vmatprep.subr.mxu0 0.0
    %1778 = vmatpush2.msra.mxu0 0.0
    %1779 = vmatprep.subr.mxu0 0.0
    %1780 = vmatpush2.msra.mxu0 0.0
    %1781 = vmatprep.subr.mxu0 0.0
    %1782 = vmatpush2.msra.mxu0 0.0
    %1783 = vmatprep.subr.mxu0 0.0
    %1784 = vmatpush2.msra.mxu0 0.0
    %1785 = vmatprep.subr.mxu0 0.0
    %1786 = vmatpush2.msra.mxu0 0.0
    %1787 = vmatprep.subr.mxu0 0.0
    %1788 = vmatpush2.msra.mxu0 0.0
    %1789 = vmatprep.subr.mxu0 0.0
    %1790 = vmatpush2.msra.mxu0 0.0
    %1791 = vmatprep.subr.mxu0 0.0
    %1792 = vmatpush2.msra.mxu0 0.0
    %1793 = vmatprep.subr.mxu0 0.0
    %1794 = vmatpush2.msra.mxu0 0.0
    %1795 = vmatprep.subr.mxu0 0.0
    %1796 = vmatpush2.msra.mxu0 0.0
    %1797 = vmatprep.subr.mxu0 0.0
    %1798 = vmatpush2.msra.mxu0 0.0
    %1799 = vmatprep.mubr.f32.mxu0 0.0
    %1800 = vmatmul.mubr.f32.gmra.mxu0 %v1721
    %v1801 = vpop.f32.mrf.mxu0
    %v1802 = vadd.f32 0.0, %v1801
    %v1803 = vpop.f32.mrf.mxu0
    %v1804 = vadd.f32 0.0, %v1803
    %1805 = vdwg.mxu0
    %1806 = vmatprep.subr.mxu0 0.0
    %1807 = vmatpush1.msra.mxu0 0.0
    %1808 = vmatprep.subr.mxu0 0.0
    %1809 = vmatpush1.msra.mxu0 0.0
    %1810 = vmatprep.subr.mxu0 0.0
    %1811 = vmatpush1.msra.mxu0 0.0
    %1812 = vmatprep.subr.mxu0 0.0
    %1813 = vmatpush1.msra.mxu0 0.0
    %1814 = vmatprep.subr.mxu0 0.0
    %1815 = vmatpush1.msra.mxu0 0.0
    %1816 = vmatprep.subr.mxu0 0.0
    %1817 = vmatpush1.msra.mxu0 0.0
    %1818 = vmatprep.subr.mxu0 0.0
    %1819 = vmatpush1.msra.mxu0 0.0
    %1820 = vmatprep.subr.mxu0 0.0
    %1821 = vmatpush1.msra.mxu0 0.0
    %1822 = vmatprep.subr.mxu0 0.0
    %1823 = vmatpush1.msra.mxu0 0.0
    %1824 = vmatprep.subr.mxu0 0.0
    %1825 = vmatpush1.msra.mxu0 0.0
    %1826 = vmatprep.subr.mxu0 0.0
    %1827 = vmatpush1.msra.mxu0 0.0
    %1828 = vmatprep.subr.mxu0 0.0
    %1829 = vmatpush1.msra.mxu0 0.0
    %1830 = vmatprep.subr.mxu0 0.0
    %1831 = vmatpush1.msra.mxu0 0.0
    %1832 = vmatprep.subr.mxu0 0.0
    %1833 = vmatpush1.msra.mxu0 0.0
    %1834 = vmatprep.subr.mxu0 0.0
    %1835 = vmatpush1.msra.mxu0 0.0
    %1836 = vmatprep.subr.mxu0 %v1733
    %1837 = vmatpush1.msra.mxu0 %v1730
    %1838 = vmatprep.subr.mxu0 0.0
    %1839 = vmatpush2.msra.mxu0 0.0
    %1840 = vmatprep.subr.mxu0 0.0
    %1841 = vmatpush2.msra.mxu0 0.0
    %1842 = vmatprep.subr.mxu0 0.0
    %1843 = vmatpush2.msra.mxu0 0.0
    %1844 = vmatprep.subr.mxu0 0.0
    %1845 = vmatpush2.msra.mxu0 0.0
    %1846 = vmatprep.subr.mxu0 0.0
    %1847 = vmatpush2.msra.mxu0 0.0
    %1848 = vmatprep.subr.mxu0 0.0
    %1849 = vmatpush2.msra.mxu0 0.0
    %1850 = vmatprep.subr.mxu0 0.0
    %1851 = vmatpush2.msra.mxu0 0.0
    %1852 = vmatprep.subr.mxu0 0.0
    %1853 = vmatpush2.msra.mxu0 0.0
    %1854 = vmatprep.subr.mxu0 0.0
    %1855 = vmatpush2.msra.mxu0 0.0
    %1856 = vmatprep.subr.mxu0 0.0
    %1857 = vmatpush2.msra.mxu0 0.0
    %1858 = vmatprep.subr.mxu0 0.0
    %1859 = vmatpush2.msra.mxu0 0.0
    %1860 = vmatprep.subr.mxu0 0.0
    %1861 = vmatpush2.msra.mxu0 0.0
    %1862 = vmatprep.subr.mxu0 0.0
    %1863 = vmatpush2.msra.mxu0 0.0
    %1864 = vmatprep.subr.mxu0 0.0
    %1865 = vmatpush2.msra.mxu0 0.0
    %1866 = vmatprep.subr.mxu0 0.0
    %1867 = vmatpush2.msra.mxu0 0.0
    %1868 = vmatprep.subr.mxu0 0.0
    %1869 = vmatpush2.msra.mxu0 0.0
    %1870 = vmatprep.mubr.f32.mxu0 0.0
    %1871 = vmatmul.mubr.f32.gmra.mxu0 %v1721
    %v1872 = vpop.f32.mrf.mxu0
    %v1873 = vadd.f32 0.0, %v1872
    %v1874 = vpop.f32.mrf.mxu0
    %v1875 = vadd.f32 0.0, %v1874
    %1876 = vdwg.mxu0
    %v1877 = vadd.f32 %v1669, %v1802
    %v1878 = vadd.f32 %v1670, %v1804
    %v1879 = vadd.f32 %v1671, %v1873
    %v1880 = vadd.f32 %v1672, %v1875
    %s1881 = scalar_lea.vmem %s2, 32
    %v1882 = vld [vmem:[%s1881] sm:$0xf]
    %vm1883 = vmand %vm1466, %vm675
    %vm1884 = vmand %vm1883, %vm677
    %1885 = vrot.lane.b32.xlu0 %v248, 111
    %v1886 = vpop.permute.xlu0 %1885
    %1887 = vrot.lane.b32.xlu0 %v249, 111
    %v1888 = vpop.permute.xlu0 %1887
    %1889 = vrot.lane.b32.xlu0 %v250, 111
    %v1890 = vpop.permute.xlu0 %1889
    %1891 = vrot.lane.b32.xlu0 %v251, 111
    %v1892 = vpop.permute.xlu0 %1891
    %vm1893 = vcmask 908288
    %v1894 = vsel %vm1893, %v1886, %v1888
    %v1895 = vsel %vm1893, %v1888, %v1890
    %v1896 = vsel %vm1893, %v1890, %v1892
    %v1902 = vsel %vm1893, %v1892, %v1886
    %v1903 = vsel %vm1884, 1, 0
    %v1904 = vlaneseq
    %v1905 = vshrl.u32 %v1904, 7
    %v1906 = vsub.s32 0, %v1905
    %v1907 = vrot.slane %v1903, %v1906
    %v1908 = vlaneseq
    %v1909 = vshrl.u32 %v1908, 7
    %v1910 = vsub.s32 1, %v1909
    %v1911 = vrot.slane %v1903, %v1910
    %v1912 = vlaneseq
    %v1913 = vshrl.u32 %v1912, 7
    %v1914 = vsub.s32 2, %v1913
    %v1915 = vrot.slane %v1903, %v1914
    %v1916 = vlaneseq
    %v1917 = vshrl.u32 %v1916, 7
    %v1918 = vsub.s32 3, %v1917
    %v1919 = vrot.slane %v1903, %v1918
    %vm1920 = vcmp.eq.s32.totalorder %v1907, 1
    %vm1921 = vcmp.eq.s32.totalorder %v1911, 1
    %vm1922 = vcmp.eq.s32.totalorder %v1915, 1
    %vm1923 = vcmp.eq.s32.totalorder %v1919, 1
    %v1924 = vsel %vm1920, %v1894, 0.0
    %v1925 = vsel %vm1921, %v1895, 0.0
    %v1926 = vsel %vm1922, %v1896, 0.0
    %v1927 = vsel %vm1923, %v1902, 0.0
    %v1929 = vsel %vm357, %v1882, 0
    %v1932 = vsel %vm191, %v1924, 0
    %v1935 = vsel %vm191, %v1925, 0
    %v1938 = vsel %vm191, %v1926, 0
    %v1941 = vsel %vm191, %v1927, 0
    %1943 = vmatprep.subr.mxu0 0.0
    %1944 = vmatpush1.msra.mxu0 0.0
    %1945 = vmatprep.subr.mxu0 0.0
    %1946 = vmatpush1.msra.mxu0 0.0
    %1947 = vmatprep.subr.mxu0 0.0
    %1948 = vmatpush1.msra.mxu0 0.0
    %1949 = vmatprep.subr.mxu0 0.0
    %1950 = vmatpush1.msra.mxu0 0.0
    %1951 = vmatprep.subr.mxu0 0.0
    %1952 = vmatpush1.msra.mxu0 0.0
    %1953 = vmatprep.subr.mxu0 0.0
    %1954 = vmatpush1.msra.mxu0 0.0
    %1955 = vmatprep.subr.mxu0 0.0
    %1956 = vmatpush1.msra.mxu0 0.0
    %1957 = vmatprep.subr.mxu0 0.0
    %1958 = vmatpush1.msra.mxu0 0.0
    %1959 = vmatprep.subr.mxu0 0.0
    %1960 = vmatpush1.msra.mxu0 0.0
    %1961 = vmatprep.subr.mxu0 0.0
    %1962 = vmatpush1.msra.mxu0 0.0
    %1963 = vmatprep.subr.mxu0 0.0
    %1964 = vmatpush1.msra.mxu0 0.0
    %1965 = vmatprep.subr.mxu0 0.0
    %1966 = vmatpush1.msra.mxu0 0.0
    %1967 = vmatprep.subr.mxu0 0.0
    %1968 = vmatpush1.msra.mxu0 0.0
    %1969 = vmatprep.subr.mxu0 0.0
    %1970 = vmatpush1.msra.mxu0 0.0
    %1971 = vmatprep.subr.mxu0 0.0
    %1972 = vmatpush1.msra.mxu0 0.0
    %1973 = vmatprep.subr.mxu0 %v1935
    %1974 = vmatpush1.msra.mxu0 %v1932
    %1975 = vmatprep.subr.mxu0 0.0
    %1976 = vmatpush2.msra.mxu0 0.0
    %1977 = vmatprep.subr.mxu0 0.0
    %1978 = vmatpush2.msra.mxu0 0.0
    %1979 = vmatprep.subr.mxu0 0.0
    %1980 = vmatpush2.msra.mxu0 0.0
    %1981 = vmatprep.subr.mxu0 0.0
    %1982 = vmatpush2.msra.mxu0 0.0
    %1983 = vmatprep.subr.mxu0 0.0
    %1984 = vmatpush2.msra.mxu0 0.0
    %1985 = vmatprep.subr.mxu0 0.0
    %1986 = vmatpush2.msra.mxu0 0.0
    %1987 = vmatprep.subr.mxu0 0.0
    %1988 = vmatpush2.msra.mxu0 0.0
    %1989 = vmatprep.subr.mxu0 0.0
    %1990 = vmatpush2.msra.mxu0 0.0
    %1991 = vmatprep.subr.mxu0 0.0
    %1992 = vmatpush2.msra.mxu0 0.0
    %1993 = vmatprep.subr.mxu0 0.0
    %1994 = vmatpush2.msra.mxu0 0.0
    %1995 = vmatprep.subr.mxu0 0.0
    %1996 = vmatpush2.msra.mxu0 0.0
    %1997 = vmatprep.subr.mxu0 0.0
    %1998 = vmatpush2.msra.mxu0 0.0
    %1999 = vmatprep.subr.mxu0 0.0
    %2000 = vmatpush2.msra.mxu0 0.0
    %2001 = vmatprep.subr.mxu0 0.0
    %2002 = vmatpush2.msra.mxu0 0.0
    %2003 = vmatprep.subr.mxu0 0.0
    %2004 = vmatpush2.msra.mxu0 0.0
    %2005 = vmatprep.subr.mxu0 0.0
    %2006 = vmatpush2.msra.mxu0 0.0
    %2007 = vmatprep.mubr.f32.mxu0 0.0
    %2008 = vmatmul.mubr.f32.gmra.mxu0 %v1929
    %v2009 = vpop.f32.mrf.mxu0
    %v2010 = vadd.f32 0.0, %v2009
    %v2011 = vpop.f32.mrf.mxu0
    %v2012 = vadd.f32 0.0, %v2011
    %2013 = vdwg.mxu0
    %2014 = vmatprep.subr.mxu0 0.0
    %2015 = vmatpush1.msra.mxu0 0.0
    %2016 = vmatprep.subr.mxu0 0.0
    %2017 = vmatpush1.msra.mxu0 0.0
    %2018 = vmatprep.subr.mxu0 0.0
    %2019 = vmatpush1.msra.mxu0 0.0
    %2020 = vmatprep.subr.mxu0 0.0
    %2021 = vmatpush1.msra.mxu0 0.0
    %2022 = vmatprep.subr.mxu0 0.0
    %2023 = vmatpush1.msra.mxu0 0.0
    %2024 = vmatprep.subr.mxu0 0.0
    %2025 = vmatpush1.msra.mxu0 0.0
    %2026 = vmatprep.subr.mxu0 0.0
    %2027 = vmatpush1.msra.mxu0 0.0
    %2028 = vmatprep.subr.mxu0 0.0
    %2029 = vmatpush1.msra.mxu0 0.0
    %2030 = vmatprep.subr.mxu0 0.0
    %2031 = vmatpush1.msra.mxu0 0.0
    %2032 = vmatprep.subr.mxu0 0.0
    %2033 = vmatpush1.msra.mxu0 0.0
    %2034 = vmatprep.subr.mxu0 0.0
    %2035 = vmatpush1.msra.mxu0 0.0
    %2036 = vmatprep.subr.mxu0 0.0
    %2037 = vmatpush1.msra.mxu0 0.0
    %2038 = vmatprep.subr.mxu0 0.0
    %2039 = vmatpush1.msra.mxu0 0.0
    %2040 = vmatprep.subr.mxu0 0.0
    %2041 = vmatpush1.msra.mxu0 0.0
    %2042 = vmatprep.subr.mxu0 0.0
    %2043 = vmatpush1.msra.mxu0 0.0
    %2044 = vmatprep.subr.mxu0 %v1941
    %2045 = vmatpush1.msra.mxu0 %v1938
    %2046 = vmatprep.subr.mxu0 0.0
    %2047 = vmatpush2.msra.mxu0 0.0
    %2048 = vmatprep.subr.mxu0 0.0
    %2049 = vmatpush2.msra.mxu0 0.0
    %2050 = vmatprep.subr.mxu0 0.0
    %2051 = vmatpush2.msra.mxu0 0.0
    %2052 = vmatprep.subr.mxu0 0.0
    %2053 = vmatpush2.msra.mxu0 0.0
    %2054 = vmatprep.subr.mxu0 0.0
    %2055 = vmatpush2.msra.mxu0 0.0
    %2056 = vmatprep.subr.mxu0 0.0
    %2057 = vmatpush2.msra.mxu0 0.0
    %2058 = vmatprep.subr.mxu0 0.0
    %2059 = vmatpush2.msra.mxu0 0.0
    %2060 = vmatprep.subr.mxu0 0.0
    %2061 = vmatpush2.msra.mxu0 0.0
    %2062 = vmatprep.subr.mxu0 0.0
    %2063 = vmatpush2.msra.mxu0 0.0
    %2064 = vmatprep.subr.mxu0 0.0
    %2065 = vmatpush2.msra.mxu0 0.0
    %2066 = vmatprep.subr.mxu0 0.0
    %2067 = vmatpush2.msra.mxu0 0.0
    %2068 = vmatprep.subr.mxu0 0.0
    %2069 = vmatpush2.msra.mxu0 0.0
    %2070 = vmatprep.subr.mxu0 0.0
    %2071 = vmatpush2.msra.mxu0 0.0
    %2072 = vmatprep.subr.mxu0 0.0
    %2073 = vmatpush2.msra.mxu0 0.0
    %2074 = vmatprep.subr.mxu0 0.0
    %2075 = vmatpush2.msra.mxu0 0.0
    %2076 = vmatprep.subr.mxu0 0.0
    %2077 = vmatpush2.msra.mxu0 0.0
    %2078 = vmatprep.mubr.f32.mxu0 0.0
    %2079 = vmatmul.mubr.f32.gmra.mxu0 %v1929
    %v2080 = vpop.f32.mrf.mxu0
    %v2081 = vadd.f32 0.0, %v2080
    %v2082 = vpop.f32.mrf.mxu0
    %v2083 = vadd.f32 0.0, %v2082
    %2084 = vdwg.mxu0
    %v2085 = vadd.f32 %v1877, %v2010
    %v2086 = vadd.f32 %v1878, %v2012
    %v2087 = vadd.f32 %v1879, %v2081
    %v2088 = vadd.f32 %v1880, %v2083
    %v2089 = vld [vmem:[%s5] sm:$0xf]
    %v2090 = vsel %vm191, %v2085, 0.0
    %v2091 = vsel %vm191, %v2086, 0.0
    %v2092 = vadd.f32 %v2090, %v2091
    %v2093 = vsel %vm191, %v2087, 0.0
    %v2094 = vadd.f32 %v2092, %v2093
    %v2095 = vsel %vm191, %v2088, 0.0
    %v2096 = vadd.f32 %v2094, %v2095
    %2097 = vadd.xlane.f32.xlu0 %v2096
    %v2098 = vpop.xlane.xlu0 %2097
    %v2099 = vmul.f32 %v2098, %v201
    %v2100 = vsub.f32 %v2085, %v2099
    %v2101 = vsub.f32 %v2086, %v2099
    %v2102 = vsub.f32 %v2087, %v2099
    %v2103 = vsub.f32 %v2088, %v2099
    %v2104 = vmul.f32 %v2100, %v2100
    %v2105 = vmul.f32 %v2101, %v2101
    %v2106 = vmul.f32 %v2102, %v2102
    %v2107 = vmul.f32 %v2103, %v2103
    %v2108 = vsel %vm191, %v2104, 0.0
    %v2109 = vsel %vm191, %v2105, 0.0
    %v2110 = vadd.f32 %v2108, %v2109
    %v2111 = vsel %vm191, %v2106, 0.0
    %v2112 = vadd.f32 %v2110, %v2111
    %v2113 = vsel %vm191, %v2107, 0.0
    %v2114 = vadd.f32 %v2112, %v2113
    %2115 = vadd.xlane.f32.xlu0 %v2114
    %v2116 = vpop.xlane.xlu0 %2115
    %v2117 = vmul.f32 %v2116, %v201
    %v2118 = vadd.f32 %v2117, 1e-05
    %v2119 = vrsqrt.pop %v2118
    %v2120 = vmul.f32 %v2089, %v2119
    %v2121 = vmul.f32 %v2099, %v2120
    %2123 = vrot.lane.b32.xlu0 %v2121, 1
    %v2124 = vpop.permute.xlu0 %2123
    %v2126 = vsub.f32 %v2089, %v2124
    %2128 = vset.pattern.permute.xlu0 0
    %2129 = vperm.xlu0 %2128, %v2120
    %v2130 = vpop.permute.xlu0 %2129
    %v2132 = vmul.f32 %v2085, %v2130
    %v2133 = vmul.f32 %v2086, %v2130
    %v2134 = vmul.f32 %v2087, %v2130
    %v2135 = vmul.f32 %v2088, %v2130
    %2137 = vset.pattern.permute.xlu0 1
    %2138 = vperm.xlu0 %2137, %v2126
    %v2139 = vpop.permute.xlu0 %2138
    %v2141 = vadd.f32 %v2132, %v2139
    %v2142 = vadd.f32 %v2133, %v2139
    %v2143 = vadd.f32 %v2134, %v2139
    %v2144 = vadd.f32 %v2135, %v2139
    %v2145 = vmax.f32 %v2141, 0.0
    %v2146 = vmax.f32 %v2142, 0.0
    %v2147 = vmax.f32 %v2143, 0.0
    %v2148 = vmax.f32 %v2144, 0.0
    %v2149 = vld [vmem:[%s3] sm:$0xff]
    %v2150 = vld [vmem:[%s3 + $0x8] sm:$0xff]
    %v2152 = vsel %vm357, %v2149, 0
    %v2155 = vsel %vm357, %v2150, 0
    %v2158 = vsel %vm191, %v2145, 0
    %v2161 = vsel %vm191, %v2146, 0
    %v2164 = vsel %vm191, %v2147, 0
    %v2167 = vsel %vm191, %v2148, 0
    %2169 = vmatprep.subr.mxu0 0.0
    %2170 = vmatpush1.msra.mxu0 0.0
    %2171 = vmatprep.subr.mxu0 0.0
    %2172 = vmatpush1.msra.mxu0 0.0
    %2173 = vmatprep.subr.mxu0 0.0
    %2174 = vmatpush1.msra.mxu0 0.0
    %2175 = vmatprep.subr.mxu0 0.0
    %2176 = vmatpush1.msra.mxu0 0.0
    %2177 = vmatprep.subr.mxu0 0.0
    %2178 = vmatpush1.msra.mxu0 0.0
    %2179 = vmatprep.subr.mxu0 0.0
    %2180 = vmatpush1.msra.mxu0 0.0
    %2181 = vmatprep.subr.mxu0 0.0
    %2182 = vmatpush1.msra.mxu0 0.0
    %2183 = vmatprep.subr.mxu0 0.0
    %2184 = vmatpush1.msra.mxu0 0.0
    %2185 = vmatprep.subr.mxu0 0.0
    %2186 = vmatpush1.msra.mxu0 0.0
    %2187 = vmatprep.subr.mxu0 0.0
    %2188 = vmatpush1.msra.mxu0 0.0
    %2189 = vmatprep.subr.mxu0 0.0
    %2190 = vmatpush1.msra.mxu0 0.0
    %2191 = vmatprep.subr.mxu0 0.0
    %2192 = vmatpush1.msra.mxu0 0.0
    %2193 = vmatprep.subr.mxu0 0.0
    %2194 = vmatpush1.msra.mxu0 0.0
    %2195 = vmatprep.subr.mxu0 0.0
    %2196 = vmatpush1.msra.mxu0 0.0
    %2197 = vmatprep.subr.mxu0 0.0
    %2198 = vmatpush1.msra.mxu0 0.0
    %2199 = vmatprep.subr.mxu0 %v2161
    %2200 = vmatpush1.msra.mxu0 %v2158
    %2201 = vmatprep.subr.mxu0 0.0
    %2202 = vmatpush2.msra.mxu0 0.0
    %2203 = vmatprep.subr.mxu0 0.0
    %2204 = vmatpush2.msra.mxu0 0.0
    %2205 = vmatprep.subr.mxu0 0.0
    %2206 = vmatpush2.msra.mxu0 0.0
    %2207 = vmatprep.subr.mxu0 0.0
    %2208 = vmatpush2.msra.mxu0 0.0
    %2209 = vmatprep.subr.mxu0 0.0
    %2210 = vmatpush2.msra.mxu0 0.0
    %2211 = vmatprep.subr.mxu0 0.0
    %2212 = vmatpush2.msra.mxu0 0.0
    %2213 = vmatprep.subr.mxu0 0.0
    %2214 = vmatpush2.msra.mxu0 0.0
    %2215 = vmatprep.subr.mxu0 0.0
    %2216 = vmatpush2.msra.mxu0 0.0
    %2217 = vmatprep.subr.mxu0 0.0
    %2218 = vmatpush2.msra.mxu0 0.0
    %2219 = vmatprep.subr.mxu0 0.0
    %2220 = vmatpush2.msra.mxu0 0.0
    %2221 = vmatprep.subr.mxu0 0.0
    %2222 = vmatpush2.msra.mxu0 0.0
    %2223 = vmatprep.subr.mxu0 0.0
    %2224 = vmatpush2.msra.mxu0 0.0
    %2225 = vmatprep.subr.mxu0 0.0
    %2226 = vmatpush2.msra.mxu0 0.0
    %2227 = vmatprep.subr.mxu0 0.0
    %2228 = vmatpush2.msra.mxu0 0.0
    %2229 = vmatprep.subr.mxu0 0.0
    %2230 = vmatpush2.msra.mxu0 0.0
    %2231 = vmatprep.subr.mxu0 0.0
    %2232 = vmatpush2.msra.mxu0 0.0
    %2233 = vmatprep.mubr.f32.mxu0 0.0
    %2234 = vmatmul.mubr.f32.gmra.mxu0 %v2152
    %v2235 = vpop.f32.mrf.mxu0
    %v2236 = vadd.f32 0.0, %v2235
    %v2237 = vpop.f32.mrf.mxu0
    %v2238 = vadd.f32 0.0, %v2237
    %2239 = vmatprep.mubr.f32.mxu0 0.0
    %2240 = vmatmul.mubr.f32.gmra.mxu0 %v2155
    %v2241 = vpop.f32.mrf.mxu0
    %v2242 = vadd.f32 0.0, %v2241
    %v2243 = vpop.f32.mrf.mxu0
    %v2244 = vadd.f32 0.0, %v2243
    %2245 = vdwg.mxu0
    %2246 = vmatprep.subr.mxu0 0.0
    %2247 = vmatpush1.msra.mxu0 0.0
    %2248 = vmatprep.subr.mxu0 0.0
    %2249 = vmatpush1.msra.mxu0 0.0
    %2250 = vmatprep.subr.mxu0 0.0
    %2251 = vmatpush1.msra.mxu0 0.0
    %2252 = vmatprep.subr.mxu0 0.0
    %2253 = vmatpush1.msra.mxu0 0.0
    %2254 = vmatprep.subr.mxu0 0.0
    %2255 = vmatpush1.msra.mxu0 0.0
    %2256 = vmatprep.subr.mxu0 0.0
    %2257 = vmatpush1.msra.mxu0 0.0
    %2258 = vmatprep.subr.mxu0 0.0
    %2259 = vmatpush1.msra.mxu0 0.0
    %2260 = vmatprep.subr.mxu0 0.0
    %2261 = vmatpush1.msra.mxu0 0.0
    %2262 = vmatprep.subr.mxu0 0.0
    %2263 = vmatpush1.msra.mxu0 0.0
    %2264 = vmatprep.subr.mxu0 0.0
    %2265 = vmatpush1.msra.mxu0 0.0
    %2266 = vmatprep.subr.mxu0 0.0
    %2267 = vmatpush1.msra.mxu0 0.0
    %2268 = vmatprep.subr.mxu0 0.0
    %2269 = vmatpush1.msra.mxu0 0.0
    %2270 = vmatprep.subr.mxu0 0.0
    %2271 = vmatpush1.msra.mxu0 0.0
    %2272 = vmatprep.subr.mxu0 0.0
    %2273 = vmatpush1.msra.mxu0 0.0
    %2274 = vmatprep.subr.mxu0 0.0
    %2275 = vmatpush1.msra.mxu0 0.0
    %2276 = vmatprep.subr.mxu0 %v2167
    %2277 = vmatpush1.msra.mxu0 %v2164
    %2278 = vmatprep.subr.mxu0 0.0
    %2279 = vmatpush2.msra.mxu0 0.0
    %2280 = vmatprep.subr.mxu0 0.0
    %2281 = vmatpush2.msra.mxu0 0.0
    %2282 = vmatprep.subr.mxu0 0.0
    %2283 = vmatpush2.msra.mxu0 0.0
    %2284 = vmatprep.subr.mxu0 0.0
    %2285 = vmatpush2.msra.mxu0 0.0
    %2286 = vmatprep.subr.mxu0 0.0
    %2287 = vmatpush2.msra.mxu0 0.0
    %2288 = vmatprep.subr.mxu0 0.0
    %2289 = vmatpush2.msra.mxu0 0.0
    %2290 = vmatprep.subr.mxu0 0.0
    %2291 = vmatpush2.msra.mxu0 0.0
    %2292 = vmatprep.subr.mxu0 0.0
    %2293 = vmatpush2.msra.mxu0 0.0
    %2294 = vmatprep.subr.mxu0 0.0
    %2295 = vmatpush2.msra.mxu0 0.0
    %2296 = vmatprep.subr.mxu0 0.0
    %2297 = vmatpush2.msra.mxu0 0.0
    %2298 = vmatprep.subr.mxu0 0.0
    %2299 = vmatpush2.msra.mxu0 0.0
    %2300 = vmatprep.subr.mxu0 0.0
    %2301 = vmatpush2.msra.mxu0 0.0
    %2302 = vmatprep.subr.mxu0 0.0
    %2303 = vmatpush2.msra.mxu0 0.0
    %2304 = vmatprep.subr.mxu0 0.0
    %2305 = vmatpush2.msra.mxu0 0.0
    %2306 = vmatprep.subr.mxu0 0.0
    %2307 = vmatpush2.msra.mxu0 0.0
    %2308 = vmatprep.subr.mxu0 0.0
    %2309 = vmatpush2.msra.mxu0 0.0
    %2310 = vmatprep.mubr.f32.mxu0 0.0
    %2311 = vmatmul.mubr.f32.gmra.mxu0 %v2152
    %v2312 = vpop.f32.mrf.mxu0
    %v2313 = vadd.f32 0.0, %v2312
    %v2314 = vpop.f32.mrf.mxu0
    %v2315 = vadd.f32 0.0, %v2314
    %2316 = vmatprep.mubr.f32.mxu0 0.0
    %2317 = vmatmul.mubr.f32.gmra.mxu0 %v2155
    %v2318 = vpop.f32.mrf.mxu0
    %v2319 = vadd.f32 0.0, %v2318
    %v2320 = vpop.f32.mrf.mxu0
    %v2321 = vadd.f32 0.0, %v2320
    %2322 = vdwg.mxu0
    %v2323 = vld [vmem:[%s6] sm:$0xff]
    %v2324 = vld [vmem:[%s6 + $0x8] sm:$0xff]
    %v2325 = vadd.f32 %v2236, %v2238
    %v2326 = vadd.f32 %v2325, %v2313
    %v2327 = vadd.f32 %v2326, %v2315
    %2328 = vadd.xlane.f32.xlu0 %v2327
    %v2329 = vpop.xlane.xlu0 %2328
    %v2330 = vadd.f32 %v2242, %v2244
    %v2331 = vadd.f32 %v2330, %v2319
    %v2332 = vadd.f32 %v2331, %v2321
    %2333 = vadd.xlane.f32.xlu0 %v2332
    %v2334 = vpop.xlane.xlu0 %2333
    %v2335 = vmul.f32 %v2329, %v201
    %v2336 = vmul.f32 %v2334, %v201
    %v2337 = vsub.f32 %v2236, %v2335
    %v2338 = vsub.f32 %v2238, %v2335
    %v2339 = vsub.f32 %v2313, %v2335
    %v2340 = vsub.f32 %v2315, %v2335
    %v2341 = vsub.f32 %v2242, %v2336
    %v2342 = vsub.f32 %v2244, %v2336
    %v2343 = vsub.f32 %v2319, %v2336
    %v2344 = vsub.f32 %v2321, %v2336
    %v2345 = vmul.f32 %v2337, %v2337
    %v2346 = vmul.f32 %v2338, %v2338
    %v2347 = vmul.f32 %v2339, %v2339
    %v2348 = vmul.f32 %v2340, %v2340
    %v2349 = vmul.f32 %v2341, %v2341
    %v2350 = vmul.f32 %v2342, %v2342
    %v2351 = vmul.f32 %v2343, %v2343
    %v2352 = vmul.f32 %v2344, %v2344
    %v2353 = vadd.f32 %v2345, %v2346
    %v2354 = vadd.f32 %v2353, %v2347
    %v2355 = vadd.f32 %v2354, %v2348
    %2356 = vadd.xlane.f32.xlu0 %v2355
    %v2357 = vpop.xlane.xlu0 %2356
    %v2358 = vadd.f32 %v2349, %v2350
    %v2359 = vadd.f32 %v2358, %v2351
    %v2360 = vadd.f32 %v2359, %v2352
    %2361 = vadd.xlane.f32.xlu0 %v2360
    %v2362 = vpop.xlane.xlu0 %2361
    %v2363 = vmul.f32 %v2357, %v201
    %v2364 = vmul.f32 %v2362, %v201
    %v2365 = vadd.f32 %v2363, 1e-05
    %v2366 = vadd.f32 %v2364, 1e-05
    %v2367 = vrsqrt.pop %v2365
    %v2368 = vrsqrt.pop %v2366
    %v2369 = vmul.f32 %v2323, %v2367
    %v2370 = vmul.f32 %v2324, %v2368
    %v2371 = vmul.f32 %v2335, %v2369
    %v2372 = vmul.f32 %v2336, %v2370
    %2375 = vrot.lane.b32.xlu0 %v2371, 1
    %v2376 = vpop.permute.xlu0 %2375
    %2377 = vrot.lane.b32.xlu0 %v2372, 1
    %v2378 = vpop.permute.xlu0 %2377
    %v2381 = vsub.f32 %v2323, %v2376
    %v2382 = vsub.f32 %v2324, %v2378
    %2384 = vset.pattern.permute.xlu0 0
    %2385 = vperm.xlu0 %2384, %v2369
    %v2386 = vpop.permute.xlu0 %2385
    %2389 = vset.pattern.permute.xlu0 0
    %2390 = vperm.xlu0 %2389, %v2370
    %v2391 = vpop.permute.xlu0 %2390
    %v2393 = vmul.f32 %v2236, %v2386
    %v2394 = vmul.f32 %v2238, %v2386
    %v2395 = vmul.f32 %v2313, %v2386
    %v2396 = vmul.f32 %v2315, %v2386
    %v2397 = vmul.f32 %v2242, %v2391
    %v2398 = vmul.f32 %v2244, %v2391
    %v2399 = vmul.f32 %v2319, %v2391
    %v2400 = vmul.f32 %v2321, %v2391
    %2402 = vset.pattern.permute.xlu0 1
    %2403 = vperm.xlu0 %2402, %v2381
    %v2404 = vpop.permute.xlu0 %2403
    %2407 = vset.pattern.permute.xlu0 1
    %2408 = vperm.xlu0 %2407, %v2382
    %v2409 = vpop.permute.xlu0 %2408
    %v2411 = vadd.f32 %v2393, %v2404
    %v2412 = vadd.f32 %v2394, %v2404
    %v2413 = vadd.f32 %v2395, %v2404
    %v2414 = vadd.f32 %v2396, %v2404
    %v2415 = vadd.f32 %v2397, %v2409
    %v2416 = vadd.f32 %v2398, %v2409
    %v2417 = vadd.f32 %v2399, %v2409
    %v2418 = vadd.f32 %v2400, %v2409
    %v2419 = vadd.f32 %v2411, %v33
    %v2420 = vadd.f32 %v2412, %v34
    %v2421 = vadd.f32 %v2413, %v35
    %v2422 = vadd.f32 %v2414, %v36
    %v2423 = vadd.f32 %v2415, %v37
    %v2424 = vadd.f32 %v2416, %v38
    %v2425 = vadd.f32 %v2417, %v39
    %v2426 = vadd.f32 %v2418, %v40
    %v2427 = vmax.f32 %v2419, 0.0
    %v2428 = vmax.f32 %v2420, 0.0
    %v2429 = vmax.f32 %v2421, 0.0
    %v2430 = vmax.f32 %v2422, 0.0
    %v2431 = vmax.f32 %v2423, 0.0
    %v2432 = vmax.f32 %v2424, 0.0
    %v2433 = vmax.f32 %v2425, 0.0
    %v2434 = vmax.f32 %v2426, 0.0
    %2435 = vst [vmem:[#allocation2] sm:$0xff] %v2427
    %2436 = vst [vmem:[#allocation2 + $0x8] sm:$0xff] %v2428
    %2437 = vst [vmem:[#allocation2 + $0x10] sm:$0xff] %v2429
    %2438 = vst [vmem:[#allocation2 + $0x18] sm:$0xff] %v2430
    %2439 = vst [vmem:[#allocation2 + $0x20] sm:$0xff] %v2431
    %2440 = vst [vmem:[#allocation2 + $0x28] sm:$0xff] %v2432
    %2441 = vst [vmem:[#allocation2 + $0x30] sm:$0xff] %v2433
    %2442 = vst [vmem:[#allocation2 + $0x38] sm:$0xff] %v2434
    // Predicated region
    $region38: #{tpu_custom_call.1} parent=1 // pred_check
      _
    $region39: #{tpu_custom_call.1} parent=1 // pred_check_branch
      %2444 = sbr.rel (0) target = $region41
    $region40: #{tpu_custom_call.1} parent=1 // pred_region
      %s2446 = ssub.s32 1024, 1024
      %2447 = vsyncadd [#allocation3], %s2446
      %s2448 = sshll.u32 [#allocation2], 4
      %s2449 = int_to_ptr.vmem [resolvable:$true] %s2448
      %2454 = dma.vmem_to_hbm [thread:$0]  %s2449, 1024, %s9, [#allocation3], 512, 512, 32
    $region41: #{tpu_custom_call.1} parent=1 // pred_fallthru
      _
    // Predicated region
    $region42: #{tpu_custom_call.1} parent=1 // pred_check
      _
    $region43: #{tpu_custom_call.1} parent=1 // pred_check_branch
      %2456 = sbr.rel (0) target = $region45
    $region44: #{tpu_custom_call.1} parent=1 // pred_region
      %2457 = dma.done [#allocation3], 1024
    $region45: #{tpu_custom_call.1} parent=1 // pred_fallthru
      _
    %2458 = vsyncpa [#allocation3], 1

</llo_original>
